<compile_context>
chip_gen: v6e
topology: v6e:2x2x1
jax: 0.10.0
libtpu: 0.0.40
codegen_flags: <defaults>
</compile_context>

<pallas_src>
import functools
import math

import jax
import jax.numpy as jnp
import numpy as np
from jax.experimental import pallas as pl
from jax.experimental.pallas import tpu as pltpu


def _disk_kin_kernel(slab_ref, out_ref, *, r_min, dr, r_bins, rb_pad):
    """Accumulate the (8, rb_pad) moment histogram for one particle tile."""
    s = pl.program_id(1)

    # Output block index depends only on the leading (parallel) axis, so the
    # output stays resident across the inner reduction axis: init at s == 0,
    # accumulate every step, Pallas writes it back when the split changes.
    @pl.when(s == 0)
    def _():
        out_ref[...] = jnp.zeros_like(out_ref)

    d = slab_ref[...]                     # (8, TN): x, y, z, vx, vy, vz, m, pad
    x, y = d[0:1, :], d[1:2, :]
    vx, vy, vz = d[3:4, :], d[4:5, :], d[5:6, :]
    m = d[6:7, :]

    r_cyl = jnp.sqrt(x * x + y * y)
    inv_r = 1.0 / jnp.maximum(r_cyl, 1e-30)        # single divide; never inf/NaN
    ibin = jnp.floor((r_cyl - r_min) / dr).astype(jnp.int32)   # (1, TN)
    gd = (ibin >= 0) & (ibin < r_bins)
    ibin = jnp.where(gd, ibin, -1)                 # fold mask into the index

    v_r = (x * vx + y * vy) * inv_r
    v_phi = (y * vx - x * vy) * inv_r

    ones = jnp.ones_like(v_r)
    zeros = jnp.zeros_like(v_r)
    # Q: (8, TN) rows: [1, v_r, v_r^2, v_phi, v_phi^2, v_z, v_z^2, 0(pad)]
    q = jnp.concatenate(
        [ones, v_r, v_r * v_r, v_phi, v_phi * v_phi, vz, vz * vz, zeros], axis=0)

    # One-hot mass weights, bin axis on sublanes, particle axis on lanes.
    bidx = jax.lax.broadcasted_iota(jnp.int32, (rb_pad, x.shape[1]), 0)
    w_t = jnp.where(bidx == ibin, m, 0.0)          # (rb_pad, TN)

    # hist[k, b] += sum_n q[k, n] * w_t[b, n]   (contract particle axis, MXU)
    out_ref[...] += jax.lax.dot_general(
        q, w_t, dimension_numbers=(((1,), (1,)), ((), ())),
        preferred_element_type=jnp.float32)


def disk_kinematics(positions, velocities, masses,
                    r_range=(0.0, 10.0), r_bins=20, tn=8192, n_splits=2):
    """Pallas implementation of DiskKinematics.forward (physical=False).

    positions, velocities: (N, 3) float32 ; masses: (N,) float32
    returns (6, r_bins) float32
    """
    rb_pad = max(32, -(-r_bins // 8) * 8)          # lane padding of the bin axis
    assert r_bins <= rb_pad
    r_min = float(r_range[0])
    dr = float(r_range[1] - r_range[0]) / r_bins

    n = positions.shape[0]
    # Adapt the tile so tiny inputs do not balloon into padding-only work.
    per_split = -(-n // n_splits)
    tn = max(512, min(tn, -(-per_split // 512) * 512))
    chunk = n_splits * tn
    n_pad_total = -(-n // chunk) * chunk
    steps_per_split = n_pad_total // chunk

    # Fused coordinate-major slab (8, Npad). Padded particles get mass 0 (and
    # zero coords), so they contribute exactly nothing.
    pos_t = positions.T.astype(jnp.float32)            # (3, N)
    vel_t = velocities.T.astype(jnp.float32)           # (3, N)
    m_t = masses.reshape(1, -1).astype(jnp.float32)    # (1, N)
    pad_t = jnp.zeros((1, n), jnp.float32)
    slab = jnp.concatenate([pos_t, vel_t, m_t, pad_t], axis=0)   # (8, N)
    if n_pad_total > n:
        slab = jnp.pad(slab, ((0, 0), (0, n_pad_total - n)))

    kernel = functools.partial(_disk_kin_kernel, r_min=r_min, dr=dr,
                               r_bins=r_bins, rb_pad=rb_pad)

    hist_parts = pl.pallas_call(
        kernel,
        out_shape=jax.ShapeDtypeStruct((n_splits, 8, rb_pad), jnp.float32),
        grid=(n_splits, steps_per_split),
        in_specs=[
            pl.BlockSpec((8, tn), lambda c, s: (0, c * steps_per_split + s)),
        ],
        out_specs=pl.BlockSpec((None, 8, rb_pad), lambda c, s: (c, 0, 0)),
        compiler_params=pltpu.CompilerParams(
            dimension_semantics=("parallel", "arbitrary")),
    )(slab)

    # Tiny finalize (8 x rb_pad elements) in plain JAX: combine the per-core
    # partial histograms and form means / dispersions.
    hist = hist_parts.sum(axis=0)                  # (8, rb_pad)
    hm = hist[0, :r_bins]
    vr_m = hist[1, :r_bins] / hm
    vr2_m = hist[2, :r_bins] / hm
    vphi_m = hist[3, :r_bins] / hm
    vphi2_m = hist[4, :r_bins] / hm
    vz_m = hist[5, :r_bins] / hm
    vz2_m = hist[6, :r_bins] / hm

    def _sig(m2, m1):
        return jnp.sqrt(jnp.maximum(m2 - m1 * m1, 0.0))

    return jnp.stack([vphi_m, _sig(vphi2_m, vphi_m),
                      vr_m, _sig(vr2_m, vr_m),
                      vz_m, _sig(vz2_m, vz_m)])


def disk_kinematics_ref(positions, velocities, masses,
                        r_range=(0.0, 10.0), r_bins=20):
    """Plain-JAX reference mirroring the PyTorch code (scatter-add path)."""
    r_min = float(r_range[0])
    dr = float(r_range[1] - r_range[0]) / r_bins
    x, y = positions[:, 0], positions[:, 1]
    vx, vy, vz = velocities[:, 0], velocities[:, 1], velocities[:, 2]
    r_cyl = jnp.sqrt(x * x + y * y)
    i = jnp.floor((r_cyl - r_min) / dr).astype(jnp.int32)
    gd = (i >= 0) & (i < r_bins)
    v_r = (x * vx + y * vy) / r_cyl
    v_phi = (y * vx - x * vy) / r_cyl

    idx = jnp.where(gd, i, 0)

    def in_bin(q):
        w = jnp.where(gd, masses * q, 0.0)
        return jnp.zeros((r_bins,), jnp.float32).at[idx].add(w)

    hm = in_bin(jnp.ones_like(masses))
    vr_m, vr2_m = in_bin(v_r) / hm, in_bin(v_r ** 2) / hm
    vphi_m, vphi2_m = in_bin(v_phi) / hm, in_bin(v_phi ** 2) / hm
    vz_m, vz2_m = in_bin(vz) / hm, in_bin(vz ** 2) / hm
    return jnp.stack([
        vphi_m, jnp.sqrt(vphi2_m - vphi_m ** 2),
        vr_m, jnp.sqrt(vr2_m - vr_m ** 2),
        vz_m, jnp.sqrt(vz2_m - vz_m ** 2)])


if __name__ == "__main__":
    key = jax.random.PRNGKey(0)
    k1, k2, k3, k4, k5 = jax.random.split(key, 5)

    N = 4096
    r_bins = 20
    r_range = (0.0, 10.0)

    # Deterministic synthetic "snapshot": disk-like particle distribution.
    r = jax.random.uniform(k1, (N,), minval=0.1, maxval=9.9)
    theta = jax.random.uniform(k2, (N,), minval=0.0, maxval=2.0 * math.pi)
    x = r * jnp.cos(theta)
    y = r * jnp.sin(theta)
    z = 0.3 * jax.random.normal(k3, (N,))
    positions = jnp.stack([x, y, z], axis=1).astype(jnp.float32)      # (N, 3)
    velocities = (50.0 * jax.random.normal(k4, (N, 3))
                  + jnp.array([0.0, 200.0, 10.0])).astype(jnp.float32)  # (N, 3)
    masses = jax.random.uniform(k5, (N,), minval=0.5, maxval=1.5).astype(jnp.float32)

    kin = disk_kinematics(positions, velocities, masses,
                          r_range=r_range, r_bins=r_bins)
    kin = jax.block_until_ready(kin)

    ref = jax.block_until_ready(
        disk_kinematics_ref(positions, velocities, masses,
                            r_range=r_range, r_bins=r_bins))

    assert kin.shape == (6, r_bins) and kin.dtype == jnp.float32
    np.testing.assert_allclose(np.asarray(kin), np.asarray(ref),
                               rtol=2e-3, atol=2e-3)

    print("KERNEL_OK")
</pallas_src>

<mosaic_0001>
module attributes {stable_mosaic.version = 11 : i64} {
  func.func @_disk_kin_kernel(%arg0: i32, %arg1: i32, %arg2: memref<8x2048xf32, #tpu.memory_space<vmem>>, %arg3: memref<1x8x32xf32, #tpu.memory_space<vmem>>) attributes {dimension_semantics = [#tpu.dimension_semantics<parallel>, #tpu.dimension_semantics<arbitrary>], iteration_bounds = array<i64: 2, 1>, scalar_prefetch = 0 : i64, scratch_operands = 0 : i64, tpu.core_type = #tpu.core_type<tc>, window_params = [{transform_indices = @transform_0, window_bounds = array<i64: 8, 2048>}, {transform_indices = @transform_1, window_bounds = array<i64: 1, 8, 32>}]} {
    %c0_i32 = arith.constant 0 : i32
    %0 = arith.cmpi eq, %arg1, %c0_i32 : i32
    %1 = arith.extui %0 : i1 to i32
    %c0_i32_0 = arith.constant 0 : i32
    %2 = arith.cmpi ne, %1, %c0_i32_0 : i32
    scf.if %2 {
      %cst_16 = arith.constant 0.000000e+00 : f32
      %59 = vector.broadcast %cst_16 : f32 to vector<8x32xf32>
      %c0_17 = arith.constant 0 : index
      %c0_18 = arith.constant 0 : index
      %c0_19 = arith.constant 0 : index
      %60 = vector.load %arg3[%c0_17, %c0_18, %c0_19] : memref<1x8x32xf32, #tpu.memory_space<vmem>>, vector<1x8x32xf32>
      %61 = vector.shape_cast %60 : vector<1x8x32xf32> to vector<8x32xf32>
      %62 = vector.shape_cast %59 : vector<8x32xf32> to vector<1x8x32xf32>
      tpu.vector_store %arg3[%c0_17, %c0_18, %c0_19], %62 {strides = array<i32>} : memref<1x8x32xf32, #tpu.memory_space<vmem>>, vector<1x8x32xf32>,
    } else {
    }
    %c0 = arith.constant 0 : index
    %c0_1 = arith.constant 0 : index
    %3 = vector.load %arg2[%c0, %c0_1] : memref<8x2048xf32, #tpu.memory_space<vmem>>, vector<8x2048xf32>
    %4 = vector.extract_strided_slice %3 {offsets = [0, 0], sizes = [1, 2048], strides = [1, 1]} : vector<8x2048xf32> to vector<1x2048xf32>
    %5 = vector.extract_strided_slice %3 {offsets = [1, 0], sizes = [1, 2048], strides = [1, 1]} : vector<8x2048xf32> to vector<1x2048xf32>
    %6 = vector.extract_strided_slice %3 {offsets = [3, 0], sizes = [1, 2048], strides = [1, 1]} : vector<8x2048xf32> to vector<1x2048xf32>
    %7 = vector.extract_strided_slice %3 {offsets = [4, 0], sizes = [1, 2048], strides = [1, 1]} : vector<8x2048xf32> to vector<1x2048xf32>
    %8 = vector.extract_strided_slice %3 {offsets = [5, 0], sizes = [1, 2048], strides = [1, 1]} : vector<8x2048xf32> to vector<1x2048xf32>
    %9 = vector.extract_strided_slice %3 {offsets = [6, 0], sizes = [1, 2048], strides = [1, 1]} : vector<8x2048xf32> to vector<1x2048xf32>
    %10 = arith.mulf %4, %4 : vector<1x2048xf32>
    %11 = arith.mulf %5, %5 : vector<1x2048xf32>
    %12 = arith.addf %10, %11 : vector<1x2048xf32>
    %13 = math.sqrt %12 : vector<1x2048xf32>
    %cst = arith.constant 1.000000e-30 : f32
    %14 = vector.broadcast %cst : f32 to vector<1x2048xf32>
    %15 = arith.maximumf %13, %14 : vector<1x2048xf32>
    %cst_2 = arith.constant 1.000000e+00 : f32
    %16 = vector.broadcast %cst_2 : f32 to vector<1x2048xf32>
    %17 = arith.divf %16, %15 : vector<1x2048xf32>
    %cst_3 = arith.constant 0.000000e+00 : f32
    %18 = vector.broadcast %cst_3 : f32 to vector<1x2048xf32>
    %19 = arith.subf %13, %18 : vector<1x2048xf32>
    %cst_4 = arith.constant 5.000000e-01 : f32
    %20 = vector.broadcast %cst_4 : f32 to vector<1x2048xf32>
    %21 = arith.divf %19, %20 : vector<1x2048xf32>
    %22 = math.floor %21 : vector<1x2048xf32>
    %23 = arith.fptosi %22 : vector<1x2048xf32> to vector<1x2048xi32>
    %c0_i32_5 = arith.constant 0 : i32
    %24 = vector.broadcast %c0_i32_5 : i32 to vector<1x2048xi32>
    %25 = arith.cmpi sge, %23, %24 : vector<1x2048xi32>
    %c20_i32 = arith.constant 20 : i32
    %26 = vector.broadcast %c20_i32 : i32 to vector<1x2048xi32>
    %27 = arith.cmpi slt, %23, %26 : vector<1x2048xi32>
    %28 = arith.andi %25, %27 : vector<1x2048xi1>
    %c-1_i32 = arith.constant -1 : i32
    %29 = vector.broadcast %c-1_i32 : i32 to vector<1x2048xi32>
    %30 = arith.select %28, %23, %29 : vector<1x2048xi1>, vector<1x2048xi32>
    %31 = arith.mulf %4, %6 : vector<1x2048xf32>
    %32 = arith.mulf %5, %7 : vector<1x2048xf32>
    %33 = arith.addf %31, %32 : vector<1x2048xf32>
    %34 = arith.mulf %33, %17 : vector<1x2048xf32>
    %35 = arith.mulf %5, %6 : vector<1x2048xf32>
    %36 = arith.mulf %4, %7 : vector<1x2048xf32>
    %37 = arith.subf %35, %36 : vector<1x2048xf32>
    %38 = arith.mulf %37, %17 : vector<1x2048xf32>
    %cst_6 = arith.constant 1.000000e+00 : f32
    %39 = vector.broadcast %cst_6 : f32 to vector<1x2048xf32>
    %cst_7 = arith.constant 0.000000e+00 : f32
    %40 = vector.broadcast %cst_7 : f32 to vector<1x2048xf32>
    %41 = arith.mulf %34, %34 : vector<1x2048xf32>
    %42 = arith.mulf %38, %38 : vector<1x2048xf32>
    %43 = arith.mulf %8, %8 : vector<1x2048xf32>
    %44 = tpu.concatenate %39, %34, %41, %38, %42, %8, %43, %40 in 0 : vector<1x2048xf32>, vector<1x2048xf32>, vector<1x2048xf32>, vector<1x2048xf32>, vector<1x2048xf32>, vector<1x2048xf32>, vector<1x2048xf32>, vector<1x2048xf32> -> vector<8x2048xf32>
    %45 = tpu.iota {dimensions = array<i32: 0>} : vector<32x2048xi32>
    %46 = vector.broadcast %30 : vector<1x2048xi32> to vector<32x2048xi32>
    %47 = arith.cmpi eq, %45, %46 : vector<32x2048xi32>
    %cst_8 = arith.constant 0.000000e+00 : f32
    %48 = vector.shape_cast %9 : vector<1x2048xf32> to vector<1x2048xf32>
    %49 = vector.broadcast %48 : vector<1x2048xf32> to vector<32x2048xf32>
    %50 = vector.broadcast %cst_8 : f32 to vector<32x2048xf32>
    %51 = arith.select %47, %49, %50 : vector<32x2048xi1>, vector<32x2048xf32>
    %c0_9 = arith.constant 0 : index
    %c0_10 = arith.constant 0 : index
    %c0_11 = arith.constant 0 : index
    %52 = vector.load %arg3[%c0_9, %c0_10, %c0_11] : memref<1x8x32xf32, #tpu.memory_space<vmem>>, vector<1x8x32xf32>
    %53 = vector.shape_cast %52 : vector<1x8x32xf32> to vector<8x32xf32>
    %cst_12 = arith.constant dense<0.000000e+00> : vector<8x32xf32>
    %54 = tpu.matmul %44, %51, %cst_12 {dimension_numbers = #tpu.dot_dimension_numbers<[1], [1], [0], [0], [0, 0, 1, 0], [], []>} : vector<8x2048xf32>, vector<32x2048xf32>, vector<8x32xf32> -> vector<8x32xf32>
    %55 = arith.addf %53, %54 : vector<8x32xf32>
    %c0_13 = arith.constant 0 : index
    %c0_14 = arith.constant 0 : index
    %c0_15 = arith.constant 0 : index
    %56 = vector.load %arg3[%c0_13, %c0_14, %c0_15] : memref<1x8x32xf32, #tpu.memory_space<vmem>>, vector<1x8x32xf32>
    %57 = vector.shape_cast %56 : vector<1x8x32xf32> to vector<8x32xf32>
    %58 = vector.shape_cast %55 : vector<8x32xf32> to vector<1x8x32xf32>
    tpu.vector_store %arg3[%c0_13, %c0_14, %c0_15], %58 {strides = array<i32>} : memref<1x8x32xf32, #tpu.memory_space<vmem>>, vector<1x8x32xf32>,
    return
  }
  func.func @transform_0(%arg0: i32, %arg1: i32) -> (i32, i32) {
    %c1_i32 = arith.constant 1 : i32
    %0 = arith.muli %arg0, %c1_i32 : i32
    %1 = arith.addi %0, %arg1 : i32
    %c0_i32 = arith.constant 0 : i32
    %c0_i32_0 = arith.constant 0 : i32
    return %c0_i32, %1 : i32, i32
  }
  func.func @transform_1(%arg0: i32, %arg1: i32) -> (i32, i32, i32) {
    %c0_i32 = arith.constant 0 : i32
    %c0_i32_0 = arith.constant 0 : i32
    %c0_i32_1 = arith.constant 0 : i32
    return %arg0, %c0_i32, %c0_i32_0 : i32, i32, i32
  }
}

</mosaic_0001>

<llo_original>
// kernel: tpu_custom_call.1
$region0: #{tpu_custom_call.1}
  #allocation0 [shape = 'u32[]', space=smem, size = 0x4, offset = 0x4, fixed_abs, tag = 'smem constant byte address 0x4 - core index']
  #allocation1 [shape = 'u32[144,128]{1,0:T(1,128)}', space=vmem, size = 0x12000, scoped, tag = 'internal scratch']
  %s0 = inlined_call_operand.hbm [shape: f32[8,4096], index: 0, kind: input, shape index: {}]
  %s1 = inlined_call_operand.hbm [shape: f32[2,8,32], index: 1, kind: output, shape index: {}]
  %s2 = sld [smem:[#allocation0]]
  $region45: #{tpu_custom_call.1} parent=0
    _
  %s4 = ssub.s32 1, %s2
  %s5 = scalar_select 0, %s4, %s2
  $region1: #{tpu_custom_call.1} parent=0
    #allocation2 [shape = 'u8[131072]{0}', space=vmem, size = 0x20000, scoped, tag = 'input window, operand 0']
    #allocation3 [shape = 's32[2]{0}', space=sflag, size = 0x8, scoped, tag = 'scoped memory for tpu_custom_call.1']
    #allocation4 [shape = 's32[2]{0}', space=sflag, size = 0x8, scoped, tag = 'scoped memory for tpu_custom_call.1']
    #allocation5 [shape = 'u8[8192]{0}', space=vmem, size = 0x2000, scoped, tag = 'output window, operand 0']
    %6 = vsyncpa [#allocation3], 0
    %s7 = scalar_lea.sflag [#allocation3], 1
    %8 = vsyncpa %s7, 0
    %9 = vsyncpa [#allocation4], 0
    %s10 = scalar_lea.sflag [#allocation4], 1
    %11 = vsyncpa %s10, 0
    loop: start=0, step=1, limit=4
    $region2: #{tpu_custom_call.1} parent=1 // loop_pre_header
      _
    $region3: #{tpu_custom_call.1} parent=1 // loop_header
      %s13 = sphi 0, %s17
      %p14 = scmp.ge.s32.totalorder %s13, 4
      %s20 = sphi 0, %s32
      %s21 = sphi 0, %s28
      %s22 = sphi 0, %s20
      %s23 = sphi 0, %s21
      %s24 = sphi 0, %s22
      %s25 = sphi 0, %s23
      %s37 = sphi 0, %s39
      %s40 = sphi 0, %s37
      %s41 = sphi 0, %s40
      %s57 = sphi 0, %s41
      %s63 = sphi 0, %s65
      %s66 = sphi 0, %s63
      %s67 = sphi 0, %s66
      %s83 = sphi 0, %s67
    $region4: #{tpu_custom_call.1} parent=1 // loop_header_branch
      %16 = sbr.rel (%p14) target = $region8
    $region5: #{tpu_custom_call.1} parent=1 // loop_body
      %s18 = ssub.s32 %s13, 1
      %s19 = ssub.s32 %s13, 2
      %s26 = sadd.s32 1, %s21
      %p27 = scmp.ge.s32.totalorder %s26, 1
      %s28 = scalar_select %p27, 0, %s26
      %s29 = sadd.s32 1, %s20
      %s30 = scalar_select %p27, %s29, %s20
      %p31 = scmp.ge.s32.totalorder %s30, 2
      %s32 = scalar_select %p31, 0, %s30
      %s33 = sadd.s32 %s20, %s21
      %s34 = sadd.s32 %s32, %s28
      %s35 = ssub.s32 %s33, %s34
      %p36 = scmp.eq.s32.totalorder %s35, 0
      %s38 = sadd.s32 %s37, 1
      %s39 = scalar_select %p36, %s37, %s38
      %p42 = pneg %p36
      %p43 = scmp.eq.s32.totalorder %s13, 1
      %p44 = por %p42, %p43
      %p45 = scmp.ne.s32.totalorder %s37, %s40
      %p46 = scmp.eq.s32.totalorder %s13, 0
      %p47 = por %p45, %p46
      %p48 = scmp.ne.s32.totalorder %s37, %s40
      %p49 = scmp.eq.s32.totalorder %s18, 1
      %p50 = por %p48, %p49
      %p51 = scmp.ne.s32.totalorder %s40, %s41
      %p52 = scmp.eq.s32.totalorder %s18, 0
      %p53 = por %p51, %p52
      %p54 = scmp.ne.s32.totalorder %s40, %s41
      %p55 = scmp.eq.s32.totalorder %s19, 1
      %p56 = por %p54, %p55
      %p58 = scmp.ne.s32.totalorder %s41, %s57
      %p59 = scmp.eq.s32.totalorder %s19, 0
      %p60 = por %p58, %p59
      %s61 = ssub.s32 %s20, %s32
      %p62 = scmp.eq.s32.totalorder %s61, 0
      %s64 = sadd.s32 %s63, 1
      %s65 = scalar_select %p62, %s63, %s64
      %p68 = pneg %p62
      %p69 = scmp.eq.s32.totalorder %s13, 1
      %p70 = por %p68, %p69
      %p71 = scmp.ne.s32.totalorder %s63, %s66
      %p72 = scmp.eq.s32.totalorder %s13, 0
      %p73 = por %p71, %p72
      %p74 = scmp.ne.s32.totalorder %s63, %s66
      %p75 = scmp.eq.s32.totalorder %s18, 1
      %p76 = por %p74, %p75
      %p77 = scmp.ne.s32.totalorder %s66, %s67
      %p78 = scmp.eq.s32.totalorder %s18, 0
      %p79 = por %p77, %p78
      %p80 = scmp.ne.s32.totalorder %s66, %s67
      %p81 = scmp.eq.s32.totalorder %s19, 1
      %p82 = por %p80, %p81
      %p84 = scmp.ne.s32.totalorder %s67, %s83
      %p85 = scmp.eq.s32.totalorder %s19, 0
      %p86 = por %p84, %p85
      %p87 = scmp.le.s32.totalorder 1, %s13
      %p88 = scmp.lt.s32.totalorder %s13, 3
      %p89 = pnand %p87, %p88
      %p90 = pneg %p89
      // Predicated region
      $region9: #{tpu_custom_call.1} parent=5 // pred_check
        _
      $region10: #{tpu_custom_call.1} parent=5 // pred_check_branch
        %92 = sbr.rel (%p89) target = $region12
      $region11: #{tpu_custom_call.1} parent=5 // pred_region
        %s93 = ssub.s32 %s13, 1
      $region12: #{tpu_custom_call.1} parent=5 // pred_fallthru
        _
      %p94 = scmp.lt.s32.totalorder %s13, 2
      // Predicated region
      $region13: #{tpu_custom_call.1} parent=5 // pred_check
        %p95 = pneg %p94
      $region14: #{tpu_custom_call.1} parent=5 // pred_check_branch
        %97 = sbr.rel (%p95) target = $region16
      $region15: #{tpu_custom_call.1} parent=5 // pred_region
        // Predicated region
        $region17: #{tpu_custom_call.1} parent=15 // pred_check
          %p98 = pneg %p47
        $region18: #{tpu_custom_call.1} parent=15 // pred_check_branch
          %100 = sbr.rel (%p98) target = $region20
        $region19: #{tpu_custom_call.1} parent=15 // pred_region
          %s101 = sand.u32 %s37, 1
          %s102 = scalar_lea.sflag [#allocation3], %s101
          %s103 = sand.u32 %s37, 1
          %s104 = smul.addr %s103, 128
          %s105 = scalar_lea.vmem [#allocation2], %s104
          %s106 = sadd.s32 %s20, %s21
          %s107 = smul.u32 16, %s106
          %s109 = ssub.s32 2048, 2048
          %110 = vsyncadd %s102, %s109
          %s111 = smul.addr %s107, 128
          %s112 = scalar_lea.hbm %s0, %s111
          %s114 = sshll.u32 %s105, 4
          %s115 = int_to_ptr.vmem [resolvable:$true] %s114
          %117 = dma.hbm_to_vmem [thread:$0]  %s112, 2048, %s115, %s102
        $region20: #{tpu_custom_call.1} parent=15 // pred_fallthru
          _
      $region16: #{tpu_custom_call.1} parent=5 // pred_fallthru
        _
      %p118 = scmp.le.s32.totalorder 1, %s13
      %p119 = scmp.lt.s32.totalorder %s13, 3
      %p120 = pnand %p118, %p119
      %p121 = pneg %p120
      // Predicated region
      $region21: #{tpu_custom_call.1} parent=5 // pred_check
        _
      $region22: #{tpu_custom_call.1} parent=5 // pred_check_branch
        %123 = sbr.rel (%p120) target = $region24
      $region23: #{tpu_custom_call.1} parent=5 // pred_region
        %s124 = ssub.s32 %s13, 1
        %s125 = sand.u32 %s40, 1
        %s126 = scalar_lea.sflag [#allocation3], %s125
        %s127 = sand.u32 %s40, 1
        %s128 = smul.addr %s127, 128
        %s129 = scalar_lea.vmem [#allocation2], %s128
        // Predicated region
        $region25: #{tpu_custom_call.1} parent=23 // pred_check
          %p130 = pneg %p53
        $region26: #{tpu_custom_call.1} parent=23 // pred_check_branch
          %132 = sbr.rel (%p130) target = $region28
        $region27: #{tpu_custom_call.1} parent=23 // pred_region
          %133 = dma.done %s126, 2048
        $region28: #{tpu_custom_call.1} parent=23 // pred_fallthru
          _
        %s134 = sand.u32 %s40, 1
        %s135 = scalar_lea.sflag [#allocation3], %s134
        %s136 = sand.u32 %s40, 1
        %s137 = smul.addr %s136, 128
        %s138 = scalar_lea.vmem [#allocation2], %s137
        %p139 = pneg %p53
        %p140 = pneg %p50
        %p141 = pneg %p79
        %p142 = pneg %p76
        %s143 = sand.u32 %s66, 1
        %s144 = scalar_lea.sflag [#allocation4], %s143
        %s145 = sand.u32 %s66, 1
        %s146 = smul.addr %s145, 8
        %s147 = scalar_lea.vmem [#allocation5], %s146
        %s148 = sadd.s32 %s22, %s23
        %s149 = smul.u32 16, %s148
        %p150 = scmp.eq.s32.totalorder %s23, 0
        // Predicated region
        $region29: #{tpu_custom_call.1} parent=23 // pred_check
          %p151 = pneg %p150
        $region30: #{tpu_custom_call.1} parent=23 // pred_check_branch
          %153 = sbr.rel (%p151) target = $region32
        $region31: #{tpu_custom_call.1} parent=23 // pred_region
          %vm154 = vcmask 261120
          %155 = vst.msk [vmem:[%s147] sm:$0xff] %vm154, 0.0
        $region32: #{tpu_custom_call.1} parent=23 // pred_fallthru
          _
        %v156 = vld [vmem:[%s129] sm:$0xff]
        %v157 = vld [vmem:[%s129 + $0x8] sm:$0xff]
        %v158 = vld [vmem:[%s129 + $0x10] sm:$0xff]
        %v159 = vld [vmem:[%s129 + $0x18] sm:$0xff]
        %v160 = vld [vmem:[%s129 + $0x20] sm:$0xff]
        %v161 = vld [vmem:[%s129 + $0x28] sm:$0xff]
        %v162 = vld [vmem:[%s129 + $0x30] sm:$0xff]
        %v163 = vld [vmem:[%s129 + $0x38] sm:$0xff]
        %v164 = vld [vmem:[%s129 + $0x40] sm:$0xff]
        %v165 = vld [vmem:[%s129 + $0x48] sm:$0xff]
        %v166 = vld [vmem:[%s129 + $0x50] sm:$0xff]
        %v167 = vld [vmem:[%s129 + $0x58] sm:$0xff]
        %v168 = vld [vmem:[%s129 + $0x60] sm:$0xff]
        %v169 = vld [vmem:[%s129 + $0x68] sm:$0xff]
        %v170 = vld [vmem:[%s129 + $0x70] sm:$0xff]
        %v171 = vld [vmem:[%s129 + $0x78] sm:$0xff]
        %v172 = vmul.f32 %v156, %v156
        %v173 = vmul.f32 %v157, %v157
        %v174 = vmul.f32 %v158, %v158
        %v175 = vmul.f32 %v159, %v159
        %v176 = vmul.f32 %v160, %v160
        %v177 = vmul.f32 %v161, %v161
        %v178 = vmul.f32 %v162, %v162
        %v179 = vmul.f32 %v163, %v163
        %v180 = vmul.f32 %v164, %v164
        %v181 = vmul.f32 %v165, %v165
        %v182 = vmul.f32 %v166, %v166
        %v183 = vmul.f32 %v167, %v167
        %v184 = vmul.f32 %v168, %v168
        %v185 = vmul.f32 %v169, %v169
        %v186 = vmul.f32 %v170, %v170
        %v187 = vmul.f32 %v171, %v171
        %v204 = vrot.slane %v172, 1
        %v205 = vrot.slane %v173, 1
        %v206 = vrot.slane %v174, 1
        %v207 = vrot.slane %v175, 1
        %v208 = vrot.slane %v176, 1
        %v209 = vrot.slane %v177, 1
        %v210 = vrot.slane %v178, 1
        %v211 = vrot.slane %v179, 1
        %v212 = vrot.slane %v180, 1
        %v213 = vrot.slane %v181, 1
        %v214 = vrot.slane %v182, 1
        %v215 = vrot.slane %v183, 1
        %v216 = vrot.slane %v184, 1
        %v217 = vrot.slane %v185, 1
        %v218 = vrot.slane %v186, 1
        %v219 = vrot.slane %v187, 1
        %v236 = vadd.f32 %v172, %v204
        %v237 = vadd.f32 %v173, %v205
        %v238 = vadd.f32 %v174, %v206
        %v239 = vadd.f32 %v175, %v207
        %v240 = vadd.f32 %v176, %v208
        %v241 = vadd.f32 %v177, %v209
        %v242 = vadd.f32 %v178, %v210
        %v243 = vadd.f32 %v179, %v211
        %v244 = vadd.f32 %v180, %v212
        %v245 = vadd.f32 %v181, %v213
        %v246 = vadd.f32 %v182, %v214
        %v247 = vadd.f32 %v183, %v215
        %v248 = vadd.f32 %v184, %v216
        %v249 = vadd.f32 %v185, %v217
        %v250 = vadd.f32 %v186, %v218
        %v251 = vadd.f32 %v187, %v219
        %v252 = vrsqrt.pop %v236
        %v253 = vmul.f32 %v236, %v252
        %vm254 = vcmp.eq.f32.partialorder %v236, inf
        %v255 = vsel %vm254, %v236, %v253
        %vm256 = vcmp.eq.f32.partialorder %v236, 0.0
        %v257 = vand.u32 %v236, 2147483648
        %v258 = vsel %vm256, %v257, %v255
        %v259 = vrsqrt.pop %v237
        %v260 = vmul.f32 %v237, %v259
        %vm261 = vcmp.eq.f32.partialorder %v237, inf
        %v262 = vsel %vm261, %v237, %v260
        %vm263 = vcmp.eq.f32.partialorder %v237, 0.0
        %v264 = vand.u32 %v237, 2147483648
        %v265 = vsel %vm263, %v264, %v262
        %v266 = vrsqrt.pop %v238
        %v267 = vmul.f32 %v238, %v266
        %vm268 = vcmp.eq.f32.partialorder %v238, inf
        %v269 = vsel %vm268, %v238, %v267
        %vm270 = vcmp.eq.f32.partialorder %v238, 0.0
        %v271 = vand.u32 %v238, 2147483648
        %v272 = vsel %vm270, %v271, %v269
        %v273 = vrsqrt.pop %v239
        %v274 = vmul.f32 %v239, %v273
        %vm275 = vcmp.eq.f32.partialorder %v239, inf
        %v276 = vsel %vm275, %v239, %v274
        %vm277 = vcmp.eq.f32.partialorder %v239, 0.0
        %v278 = vand.u32 %v239, 2147483648
        %v279 = vsel %vm277, %v278, %v276
        %v280 = vrsqrt.pop %v240
        %v281 = vmul.f32 %v240, %v280
        %vm282 = vcmp.eq.f32.partialorder %v240, inf
        %v283 = vsel %vm282, %v240, %v281
        %vm284 = vcmp.eq.f32.partialorder %v240, 0.0
        %v285 = vand.u32 %v240, 2147483648
        %v286 = vsel %vm284, %v285, %v283
        %v287 = vrsqrt.pop %v241
        %v288 = vmul.f32 %v241, %v287
        %vm289 = vcmp.eq.f32.partialorder %v241, inf
        %v290 = vsel %vm289, %v241, %v288
        %vm291 = vcmp.eq.f32.partialorder %v241, 0.0
        %v292 = vand.u32 %v241, 2147483648
        %v293 = vsel %vm291, %v292, %v290
        %v294 = vrsqrt.pop %v242
        %v295 = vmul.f32 %v242, %v294
        %vm296 = vcmp.eq.f32.partialorder %v242, inf
        %v297 = vsel %vm296, %v242, %v295
        %vm298 = vcmp.eq.f32.partialorder %v242, 0.0
        %v299 = vand.u32 %v242, 2147483648
        %v300 = vsel %vm298, %v299, %v297
        %v301 = vrsqrt.pop %v243
        %v302 = vmul.f32 %v243, %v301
        %vm303 = vcmp.eq.f32.partialorder %v243, inf
        %v304 = vsel %vm303, %v243, %v302
        %vm305 = vcmp.eq.f32.partialorder %v243, 0.0
        %v306 = vand.u32 %v243, 2147483648
        %v307 = vsel %vm305, %v306, %v304
        %v308 = vrsqrt.pop %v244
        %v309 = vmul.f32 %v244, %v308
        %vm310 = vcmp.eq.f32.partialorder %v244, inf
        %v311 = vsel %vm310, %v244, %v309
        %vm312 = vcmp.eq.f32.partialorder %v244, 0.0
        %v313 = vand.u32 %v244, 2147483648
        %v314 = vsel %vm312, %v313, %v311
        %v315 = vrsqrt.pop %v245
        %v316 = vmul.f32 %v245, %v315
        %vm317 = vcmp.eq.f32.partialorder %v245, inf
        %v318 = vsel %vm317, %v245, %v316
        %vm319 = vcmp.eq.f32.partialorder %v245, 0.0
        %v320 = vand.u32 %v245, 2147483648
        %v321 = vsel %vm319, %v320, %v318
        %v322 = vrsqrt.pop %v246
        %v323 = vmul.f32 %v246, %v322
        %vm324 = vcmp.eq.f32.partialorder %v246, inf
        %v325 = vsel %vm324, %v246, %v323
        %vm326 = vcmp.eq.f32.partialorder %v246, 0.0
        %v327 = vand.u32 %v246, 2147483648
        %v328 = vsel %vm326, %v327, %v325
        %v329 = vrsqrt.pop %v247
        %v330 = vmul.f32 %v247, %v329
        %vm331 = vcmp.eq.f32.partialorder %v247, inf
        %v332 = vsel %vm331, %v247, %v330
        %vm333 = vcmp.eq.f32.partialorder %v247, 0.0
        %v334 = vand.u32 %v247, 2147483648
        %v335 = vsel %vm333, %v334, %v332
        %v336 = vrsqrt.pop %v248
        %v337 = vmul.f32 %v248, %v336
        %vm338 = vcmp.eq.f32.partialorder %v248, inf
        %v339 = vsel %vm338, %v248, %v337
        %vm340 = vcmp.eq.f32.partialorder %v248, 0.0
        %v341 = vand.u32 %v248, 2147483648
        %v342 = vsel %vm340, %v341, %v339
        %v343 = vrsqrt.pop %v249
        %v344 = vmul.f32 %v249, %v343
        %vm345 = vcmp.eq.f32.partialorder %v249, inf
        %v346 = vsel %vm345, %v249, %v344
        %vm347 = vcmp.eq.f32.partialorder %v249, 0.0
        %v348 = vand.u32 %v249, 2147483648
        %v349 = vsel %vm347, %v348, %v346
        %v350 = vrsqrt.pop %v250
        %v351 = vmul.f32 %v250, %v350
        %vm352 = vcmp.eq.f32.partialorder %v250, inf
        %v353 = vsel %vm352, %v250, %v351
        %vm354 = vcmp.eq.f32.partialorder %v250, 0.0
        %v355 = vand.u32 %v250, 2147483648
        %v356 = vsel %vm354, %v355, %v353
        %v357 = vrsqrt.pop %v251
        %v358 = vmul.f32 %v251, %v357
        %vm359 = vcmp.eq.f32.partialorder %v251, inf
        %v360 = vsel %vm359, %v251, %v358
        %vm361 = vcmp.eq.f32.partialorder %v251, 0.0
        %v362 = vand.u32 %v251, 2147483648
        %v363 = vsel %vm361, %v362, %v360
        %v364 = vmax.f32 %v258, 1e-30
        %v365 = vmax.f32 %v265, 1e-30
        %v366 = vmax.f32 %v272, 1e-30
        %v367 = vmax.f32 %v279, 1e-30
        %v368 = vmax.f32 %v286, 1e-30
        %v369 = vmax.f32 %v293, 1e-30
        %v370 = vmax.f32 %v300, 1e-30
        %v371 = vmax.f32 %v307, 1e-30
        %v372 = vmax.f32 %v314, 1e-30
        %v373 = vmax.f32 %v321, 1e-30
        %v374 = vmax.f32 %v328, 1e-30
        %v375 = vmax.f32 %v335, 1e-30
        %v376 = vmax.f32 %v342, 1e-30
        %v377 = vmax.f32 %v349, 1e-30
        %v378 = vmax.f32 %v356, 1e-30
        %v379 = vmax.f32 %v363, 1e-30
        %v380 = vrcp.pop %v364
        %v381 = vmul.f32 1.0, %v380
        %v382 = vrcp.pop %v365
        %v383 = vmul.f32 1.0, %v382
        %v384 = vrcp.pop %v366
        %v385 = vmul.f32 1.0, %v384
        %v386 = vrcp.pop %v367
        %v387 = vmul.f32 1.0, %v386
        %v388 = vrcp.pop %v368
        %v389 = vmul.f32 1.0, %v388
        %v390 = vrcp.pop %v369
        %v391 = vmul.f32 1.0, %v390
        %v392 = vrcp.pop %v370
        %v393 = vmul.f32 1.0, %v392
        %v394 = vrcp.pop %v371
        %v395 = vmul.f32 1.0, %v394
        %v396 = vrcp.pop %v372
        %v397 = vmul.f32 1.0, %v396
        %v398 = vrcp.pop %v373
        %v399 = vmul.f32 1.0, %v398
        %v400 = vrcp.pop %v374
        %v401 = vmul.f32 1.0, %v400
        %v402 = vrcp.pop %v375
        %v403 = vmul.f32 1.0, %v402
        %v404 = vrcp.pop %v376
        %v405 = vmul.f32 1.0, %v404
        %v406 = vrcp.pop %v377
        %v407 = vmul.f32 1.0, %v406
        %v408 = vrcp.pop %v378
        %v409 = vmul.f32 1.0, %v408
        %v410 = vrcp.pop %v379
        %v411 = vmul.f32 1.0, %v410
        %v412 = vrcp.pop 0.5
        %v413 = vmul.f32 %v258, %v412
        %v414 = vmul.f32 %v265, %v412
        %v415 = vmul.f32 %v272, %v412
        %v416 = vmul.f32 %v279, %v412
        %v417 = vmul.f32 %v286, %v412
        %v418 = vmul.f32 %v293, %v412
        %v419 = vmul.f32 %v300, %v412
        %v420 = vmul.f32 %v307, %v412
        %v421 = vmul.f32 %v314, %v412
        %v422 = vmul.f32 %v321, %v412
        %v423 = vmul.f32 %v328, %v412
        %v424 = vmul.f32 %v335, %v412
        %v425 = vmul.f32 %v342, %v412
        %v426 = vmul.f32 %v349, %v412
        %v427 = vmul.f32 %v356, %v412
        %v428 = vmul.f32 %v363, %v412
        %v429 = vfloor.f32 %v413
        %v430 = vfloor.f32 %v414
        %v431 = vfloor.f32 %v415
        %v432 = vfloor.f32 %v416
        %v433 = vfloor.f32 %v417
        %v434 = vfloor.f32 %v418
        %v435 = vfloor.f32 %v419
        %v436 = vfloor.f32 %v420
        %v437 = vfloor.f32 %v421
        %v438 = vfloor.f32 %v422
        %v439 = vfloor.f32 %v423
        %v440 = vfloor.f32 %v424
        %v441 = vfloor.f32 %v425
        %v442 = vfloor.f32 %v426
        %v443 = vfloor.f32 %v427
        %v444 = vfloor.f32 %v428
        %v445 = vcvt.f32.s32.to.zero.pseudo %v429
        %v446 = vcvt.f32.s32.to.zero.pseudo %v430
        %v447 = vcvt.f32.s32.to.zero.pseudo %v431
        %v448 = vcvt.f32.s32.to.zero.pseudo %v432
        %v449 = vcvt.f32.s32.to.zero.pseudo %v433
        %v450 = vcvt.f32.s32.to.zero.pseudo %v434
        %v451 = vcvt.f32.s32.to.zero.pseudo %v435
        %v452 = vcvt.f32.s32.to.zero.pseudo %v436
        %v453 = vcvt.f32.s32.to.zero.pseudo %v437
        %v454 = vcvt.f32.s32.to.zero.pseudo %v438
        %v455 = vcvt.f32.s32.to.zero.pseudo %v439
        %v456 = vcvt.f32.s32.to.zero.pseudo %v440
        %v457 = vcvt.f32.s32.to.zero.pseudo %v441
        %v458 = vcvt.f32.s32.to.zero.pseudo %v442
        %v459 = vcvt.f32.s32.to.zero.pseudo %v443
        %v460 = vcvt.f32.s32.to.zero.pseudo %v444
        %vm461 = vcmp.ge.s32.totalorder %v445, 0
        %vm462 = vcmp.ge.s32.totalorder %v446, 0
        %vm463 = vcmp.ge.s32.totalorder %v447, 0
        %vm464 = vcmp.ge.s32.totalorder %v448, 0
        %vm465 = vcmp.ge.s32.totalorder %v449, 0
        %vm466 = vcmp.ge.s32.totalorder %v450, 0
        %vm467 = vcmp.ge.s32.totalorder %v451, 0
        %vm468 = vcmp.ge.s32.totalorder %v452, 0
        %vm469 = vcmp.ge.s32.totalorder %v453, 0
        %vm470 = vcmp.ge.s32.totalorder %v454, 0
        %vm471 = vcmp.ge.s32.totalorder %v455, 0
        %vm472 = vcmp.ge.s32.totalorder %v456, 0
        %vm473 = vcmp.ge.s32.totalorder %v457, 0
        %vm474 = vcmp.ge.s32.totalorder %v458, 0
        %vm475 = vcmp.ge.s32.totalorder %v459, 0
        %vm476 = vcmp.ge.s32.totalorder %v460, 0
        %vm477 = vcmp.lt.s32.totalorder %v445, 20
        %vm478 = vcmp.lt.s32.totalorder %v446, 20
        %vm479 = vcmp.lt.s32.totalorder %v447, 20
        %vm480 = vcmp.lt.s32.totalorder %v448, 20
        %vm481 = vcmp.lt.s32.totalorder %v449, 20
        %vm482 = vcmp.lt.s32.totalorder %v450, 20
        %vm483 = vcmp.lt.s32.totalorder %v451, 20
        %vm484 = vcmp.lt.s32.totalorder %v452, 20
        %vm485 = vcmp.lt.s32.totalorder %v453, 20
        %vm486 = vcmp.lt.s32.totalorder %v454, 20
        %vm487 = vcmp.lt.s32.totalorder %v455, 20
        %vm488 = vcmp.lt.s32.totalorder %v456, 20
        %vm489 = vcmp.lt.s32.totalorder %v457, 20
        %vm490 = vcmp.lt.s32.totalorder %v458, 20
        %vm491 = vcmp.lt.s32.totalorder %v459, 20
        %vm492 = vcmp.lt.s32.totalorder %v460, 20
        %vm493 = vmand %vm461, %vm477
        %vm494 = vmand %vm462, %vm478
        %vm495 = vmand %vm463, %vm479
        %vm496 = vmand %vm464, %vm480
        %vm497 = vmand %vm465, %vm481
        %vm498 = vmand %vm466, %vm482
        %vm499 = vmand %vm467, %vm483
        %vm500 = vmand %vm468, %vm484
        %vm501 = vmand %vm469, %vm485
        %vm502 = vmand %vm470, %vm486
        %vm503 = vmand %vm471, %vm487
        %vm504 = vmand %vm472, %vm488
        %vm505 = vmand %vm473, %vm489
        %vm506 = vmand %vm474, %vm490
        %vm507 = vmand %vm475, %vm491
        %vm508 = vmand %vm476, %vm492
        %v509 = vsel %vm493, %v445, 4294967295
        %v510 = vsel %vm494, %v446, 4294967295
        %v511 = vsel %vm495, %v447, 4294967295
        %v512 = vsel %vm496, %v448, 4294967295
        %v513 = vsel %vm497, %v449, 4294967295
        %v514 = vsel %vm498, %v450, 4294967295
        %v515 = vsel %vm499, %v451, 4294967295
        %v516 = vsel %vm500, %v452, 4294967295
        %v517 = vsel %vm501, %v453, 4294967295
        %v518 = vsel %vm502, %v454, 4294967295
        %v519 = vsel %vm503, %v455, 4294967295
        %v520 = vsel %vm504, %v456, 4294967295
        %v521 = vsel %vm505, %v457, 4294967295
        %v522 = vsel %vm506, %v458, 4294967295
        %v523 = vsel %vm507, %v459, 4294967295
        %v524 = vsel %vm508, %v460, 4294967295
        %v541 = vrot.slane %v156, 3
        %v542 = vrot.slane %v157, 3
        %v543 = vrot.slane %v158, 3
        %v544 = vrot.slane %v159, 3
        %v545 = vrot.slane %v160, 3
        %v546 = vrot.slane %v161, 3
        %v547 = vrot.slane %v162, 3
        %v548 = vrot.slane %v163, 3
        %v549 = vrot.slane %v164, 3
        %v550 = vrot.slane %v165, 3
        %v551 = vrot.slane %v166, 3
        %v552 = vrot.slane %v167, 3
        %v553 = vrot.slane %v168, 3
        %v554 = vrot.slane %v169, 3
        %v555 = vrot.slane %v170, 3
        %v556 = vrot.slane %v171, 3
        %v573 = vmul.f32 %v156, %v541
        %v574 = vmul.f32 %v157, %v542
        %v575 = vmul.f32 %v158, %v543
        %v576 = vmul.f32 %v159, %v544
        %v577 = vmul.f32 %v160, %v545
        %v578 = vmul.f32 %v161, %v546
        %v579 = vmul.f32 %v162, %v547
        %v580 = vmul.f32 %v163, %v548
        %v581 = vmul.f32 %v164, %v549
        %v582 = vmul.f32 %v165, %v550
        %v583 = vmul.f32 %v166, %v551
        %v584 = vmul.f32 %v167, %v552
        %v585 = vmul.f32 %v168, %v553
        %v586 = vmul.f32 %v169, %v554
        %v587 = vmul.f32 %v170, %v555
        %v588 = vmul.f32 %v171, %v556
        %v605 = vrot.slane %v573, 1
        %v606 = vrot.slane %v574, 1
        %v607 = vrot.slane %v575, 1
        %v608 = vrot.slane %v576, 1
        %v609 = vrot.slane %v577, 1
        %v610 = vrot.slane %v578, 1
        %v611 = vrot.slane %v579, 1
        %v612 = vrot.slane %v580, 1
        %v613 = vrot.slane %v581, 1
        %v614 = vrot.slane %v582, 1
        %v615 = vrot.slane %v583, 1
        %v616 = vrot.slane %v584, 1
        %v617 = vrot.slane %v585, 1
        %v618 = vrot.slane %v586, 1
        %v619 = vrot.slane %v587, 1
        %v620 = vrot.slane %v588, 1
        %v637 = vadd.f32 %v573, %v605
        %v638 = vadd.f32 %v574, %v606
        %v639 = vadd.f32 %v575, %v607
        %v640 = vadd.f32 %v576, %v608
        %v641 = vadd.f32 %v577, %v609
        %v642 = vadd.f32 %v578, %v610
        %v643 = vadd.f32 %v579, %v611
        %v644 = vadd.f32 %v580, %v612
        %v645 = vadd.f32 %v581, %v613
        %v646 = vadd.f32 %v582, %v614
        %v647 = vadd.f32 %v583, %v615
        %v648 = vadd.f32 %v584, %v616
        %v649 = vadd.f32 %v585, %v617
        %v650 = vadd.f32 %v586, %v618
        %v651 = vadd.f32 %v587, %v619
        %v652 = vadd.f32 %v588, %v620
        %v653 = vmul.f32 %v637, %v381
        %v654 = vmul.f32 %v638, %v383
        %v655 = vmul.f32 %v639, %v385
        %v656 = vmul.f32 %v640, %v387
        %v657 = vmul.f32 %v641, %v389
        %v658 = vmul.f32 %v642, %v391
        %v659 = vmul.f32 %v643, %v393
        %v660 = vmul.f32 %v644, %v395
        %v661 = vmul.f32 %v645, %v397
        %v662 = vmul.f32 %v646, %v399
        %v663 = vmul.f32 %v647, %v401
        %v664 = vmul.f32 %v648, %v403
        %v665 = vmul.f32 %v649, %v405
        %v666 = vmul.f32 %v650, %v407
        %v667 = vmul.f32 %v651, %v409
        %v668 = vmul.f32 %v652, %v411
        %v669 = vrot.slane %v156, 2
        %v670 = vrot.slane %v157, 2
        %v671 = vrot.slane %v158, 2
        %v672 = vrot.slane %v159, 2
        %v673 = vrot.slane %v160, 2
        %v674 = vrot.slane %v161, 2
        %v675 = vrot.slane %v162, 2
        %v676 = vrot.slane %v163, 2
        %v677 = vrot.slane %v164, 2
        %v678 = vrot.slane %v165, 2
        %v679 = vrot.slane %v166, 2
        %v680 = vrot.slane %v167, 2
        %v681 = vrot.slane %v168, 2
        %v682 = vrot.slane %v169, 2
        %v683 = vrot.slane %v170, 2
        %v684 = vrot.slane %v171, 2
        %v701 = vmul.f32 %v156, %v669
        %v702 = vmul.f32 %v157, %v670
        %v703 = vmul.f32 %v158, %v671
        %v704 = vmul.f32 %v159, %v672
        %v705 = vmul.f32 %v160, %v673
        %v706 = vmul.f32 %v161, %v674
        %v707 = vmul.f32 %v162, %v675
        %v708 = vmul.f32 %v163, %v676
        %v709 = vmul.f32 %v164, %v677
        %v710 = vmul.f32 %v165, %v678
        %v711 = vmul.f32 %v166, %v679
        %v712 = vmul.f32 %v167, %v680
        %v713 = vmul.f32 %v168, %v681
        %v714 = vmul.f32 %v169, %v682
        %v715 = vmul.f32 %v170, %v683
        %v716 = vmul.f32 %v171, %v684
        %v717 = vrot.slane %v156, 4
        %v718 = vrot.slane %v157, 4
        %v719 = vrot.slane %v158, 4
        %v720 = vrot.slane %v159, 4
        %v721 = vrot.slane %v160, 4
        %v722 = vrot.slane %v161, 4
        %v723 = vrot.slane %v162, 4
        %v724 = vrot.slane %v163, 4
        %v725 = vrot.slane %v164, 4
        %v726 = vrot.slane %v165, 4
        %v727 = vrot.slane %v166, 4
        %v728 = vrot.slane %v167, 4
        %v729 = vrot.slane %v168, 4
        %v730 = vrot.slane %v169, 4
        %v731 = vrot.slane %v170, 4
        %v732 = vrot.slane %v171, 4
        %v749 = vmul.f32 %v156, %v717
        %v750 = vmul.f32 %v157, %v718
        %v751 = vmul.f32 %v158, %v719
        %v752 = vmul.f32 %v159, %v720
        %v753 = vmul.f32 %v160, %v721
        %v754 = vmul.f32 %v161, %v722
        %v755 = vmul.f32 %v162, %v723
        %v756 = vmul.f32 %v163, %v724
        %v757 = vmul.f32 %v164, %v725
        %v758 = vmul.f32 %v165, %v726
        %v759 = vmul.f32 %v166, %v727
        %v760 = vmul.f32 %v167, %v728
        %v761 = vmul.f32 %v168, %v729
        %v762 = vmul.f32 %v169, %v730
        %v763 = vmul.f32 %v170, %v731
        %v764 = vmul.f32 %v171, %v732
        %v781 = vrot.slane %v749, 7
        %v782 = vrot.slane %v750, 7
        %v783 = vrot.slane %v751, 7
        %v784 = vrot.slane %v752, 7
        %v785 = vrot.slane %v753, 7
        %v786 = vrot.slane %v754, 7
        %v787 = vrot.slane %v755, 7
        %v788 = vrot.slane %v756, 7
        %v789 = vrot.slane %v757, 7
        %v790 = vrot.slane %v758, 7
        %v791 = vrot.slane %v759, 7
        %v792 = vrot.slane %v760, 7
        %v793 = vrot.slane %v761, 7
        %v794 = vrot.slane %v762, 7
        %v795 = vrot.slane %v763, 7
        %v796 = vrot.slane %v764, 7
        %v813 = vsub.f32 %v701, %v781
        %v814 = vsub.f32 %v702, %v782
        %v815 = vsub.f32 %v703, %v783
        %v816 = vsub.f32 %v704, %v784
        %v817 = vsub.f32 %v705, %v785
        %v818 = vsub.f32 %v706, %v786
        %v819 = vsub.f32 %v707, %v787
        %v820 = vsub.f32 %v708, %v788
        %v821 = vsub.f32 %v709, %v789
        %v822 = vsub.f32 %v710, %v790
        %v823 = vsub.f32 %v711, %v791
        %v824 = vsub.f32 %v712, %v792
        %v825 = vsub.f32 %v713, %v793
        %v826 = vsub.f32 %v714, %v794
        %v827 = vsub.f32 %v715, %v795
        %v828 = vsub.f32 %v716, %v796
        %v845 = vrot.slane %v381, 7
        %v846 = vrot.slane %v383, 7
        %v847 = vrot.slane %v385, 7
        %v848 = vrot.slane %v387, 7
        %v849 = vrot.slane %v389, 7
        %v850 = vrot.slane %v391, 7
        %v851 = vrot.slane %v393, 7
        %v852 = vrot.slane %v395, 7
        %v853 = vrot.slane %v397, 7
        %v854 = vrot.slane %v399, 7
        %v855 = vrot.slane %v401, 7
        %v856 = vrot.slane %v403, 7
        %v857 = vrot.slane %v405, 7
        %v858 = vrot.slane %v407, 7
        %v859 = vrot.slane %v409, 7
        %v860 = vrot.slane %v411, 7
        %v877 = vmul.f32 %v813, %v845
        %v878 = vmul.f32 %v814, %v846
        %v879 = vmul.f32 %v815, %v847
        %v880 = vmul.f32 %v816, %v848
        %v881 = vmul.f32 %v817, %v849
        %v882 = vmul.f32 %v818, %v850
        %v883 = vmul.f32 %v819, %v851
        %v884 = vmul.f32 %v820, %v852
        %v885 = vmul.f32 %v821, %v853
        %v886 = vmul.f32 %v822, %v854
        %v887 = vmul.f32 %v823, %v855
        %v888 = vmul.f32 %v824, %v856
        %v889 = vmul.f32 %v825, %v857
        %v890 = vmul.f32 %v826, %v858
        %v891 = vmul.f32 %v827, %v859
        %v892 = vmul.f32 %v828, %v860
        %v893 = vmul.f32 %v653, %v653
        %v894 = vmul.f32 %v654, %v654
        %v895 = vmul.f32 %v655, %v655
        %v896 = vmul.f32 %v656, %v656
        %v897 = vmul.f32 %v657, %v657
        %v898 = vmul.f32 %v658, %v658
        %v899 = vmul.f32 %v659, %v659
        %v900 = vmul.f32 %v660, %v660
        %v901 = vmul.f32 %v661, %v661
        %v902 = vmul.f32 %v662, %v662
        %v903 = vmul.f32 %v663, %v663
        %v904 = vmul.f32 %v664, %v664
        %v905 = vmul.f32 %v665, %v665
        %v906 = vmul.f32 %v666, %v666
        %v907 = vmul.f32 %v667, %v667
        %v908 = vmul.f32 %v668, %v668
        %v909 = vmul.f32 %v877, %v877
        %v910 = vmul.f32 %v878, %v878
        %v911 = vmul.f32 %v879, %v879
        %v912 = vmul.f32 %v880, %v880
        %v913 = vmul.f32 %v881, %v881
        %v914 = vmul.f32 %v882, %v882
        %v915 = vmul.f32 %v883, %v883
        %v916 = vmul.f32 %v884, %v884
        %v917 = vmul.f32 %v885, %v885
        %v918 = vmul.f32 %v886, %v886
        %v919 = vmul.f32 %v887, %v887
        %v920 = vmul.f32 %v888, %v888
        %v921 = vmul.f32 %v889, %v889
        %v922 = vmul.f32 %v890, %v890
        %v923 = vmul.f32 %v891, %v891
        %v924 = vmul.f32 %v892, %v892
        %v941 = vrot.slane %v653, 7
        %v942 = vrot.slane %v654, 7
        %v943 = vrot.slane %v655, 7
        %v944 = vrot.slane %v656, 7
        %v945 = vrot.slane %v657, 7
        %v946 = vrot.slane %v658, 7
        %v947 = vrot.slane %v659, 7
        %v948 = vrot.slane %v660, 7
        %v949 = vrot.slane %v661, 7
        %v950 = vrot.slane %v662, 7
        %v951 = vrot.slane %v663, 7
        %v952 = vrot.slane %v664, 7
        %v953 = vrot.slane %v665, 7
        %v954 = vrot.slane %v666, 7
        %v955 = vrot.slane %v667, 7
        %v956 = vrot.slane %v668, 7
        %v989 = vrot.slane %v893, 6
        %v990 = vrot.slane %v894, 6
        %v991 = vrot.slane %v895, 6
        %v992 = vrot.slane %v896, 6
        %v993 = vrot.slane %v897, 6
        %v994 = vrot.slane %v898, 6
        %v995 = vrot.slane %v899, 6
        %v996 = vrot.slane %v900, 6
        %v997 = vrot.slane %v901, 6
        %v998 = vrot.slane %v902, 6
        %v999 = vrot.slane %v903, 6
        %v1000 = vrot.slane %v904, 6
        %v1001 = vrot.slane %v905, 6
        %v1002 = vrot.slane %v906, 6
        %v1003 = vrot.slane %v907, 6
        %v1004 = vrot.slane %v908, 6
        %v1037 = vrot.slane %v877, 6
        %v1038 = vrot.slane %v878, 6
        %v1039 = vrot.slane %v879, 6
        %v1040 = vrot.slane %v880, 6
        %v1041 = vrot.slane %v881, 6
        %v1042 = vrot.slane %v882, 6
        %v1043 = vrot.slane %v883, 6
        %v1044 = vrot.slane %v884, 6
        %v1045 = vrot.slane %v885, 6
        %v1046 = vrot.slane %v886, 6
        %v1047 = vrot.slane %v887, 6
        %v1048 = vrot.slane %v888, 6
        %v1049 = vrot.slane %v889, 6
        %v1050 = vrot.slane %v890, 6
        %v1051 = vrot.slane %v891, 6
        %v1052 = vrot.slane %v892, 6
        %v1085 = vrot.slane %v909, 5
        %v1086 = vrot.slane %v910, 5
        %v1087 = vrot.slane %v911, 5
        %v1088 = vrot.slane %v912, 5
        %v1089 = vrot.slane %v913, 5
        %v1090 = vrot.slane %v914, 5
        %v1091 = vrot.slane %v915, 5
        %v1092 = vrot.slane %v916, 5
        %v1093 = vrot.slane %v917, 5
        %v1094 = vrot.slane %v918, 5
        %v1095 = vrot.slane %v919, 5
        %v1096 = vrot.slane %v920, 5
        %v1097 = vrot.slane %v921, 5
        %v1098 = vrot.slane %v922, 5
        %v1099 = vrot.slane %v923, 5
        %v1100 = vrot.slane %v924, 5
        %v1117 = vrot.slane %v172, 7
        %v1118 = vrot.slane %v173, 7
        %v1119 = vrot.slane %v174, 7
        %v1120 = vrot.slane %v175, 7
        %v1121 = vrot.slane %v176, 7
        %v1122 = vrot.slane %v177, 7
        %v1123 = vrot.slane %v178, 7
        %v1124 = vrot.slane %v179, 7
        %v1125 = vrot.slane %v180, 7
        %v1126 = vrot.slane %v181, 7
        %v1127 = vrot.slane %v182, 7
        %v1128 = vrot.slane %v183, 7
        %v1129 = vrot.slane %v184, 7
        %v1130 = vrot.slane %v185, 7
        %v1131 = vrot.slane %v186, 7
        %v1132 = vrot.slane %v187, 7
        %vm1149 = vcmask 1040384
        %v1150 = vsel %vm1149, 1.0, %v941
        %v1151 = vsel %vm1149, 1.0, %v942
        %v1152 = vsel %vm1149, 1.0, %v943
        %v1153 = vsel %vm1149, 1.0, %v944
        %v1154 = vsel %vm1149, 1.0, %v945
        %v1155 = vsel %vm1149, 1.0, %v946
        %v1156 = vsel %vm1149, 1.0, %v947
        %v1157 = vsel %vm1149, 1.0, %v948
        %v1158 = vsel %vm1149, 1.0, %v949
        %v1159 = vsel %vm1149, 1.0, %v950
        %v1160 = vsel %vm1149, 1.0, %v951
        %v1161 = vsel %vm1149, 1.0, %v952
        %v1162 = vsel %vm1149, 1.0, %v953
        %v1163 = vsel %vm1149, 1.0, %v954
        %v1164 = vsel %vm1149, 1.0, %v955
        %v1165 = vsel %vm1149, 1.0, %v956
        %vm1166 = vcmask 1041408
        %v1167 = vsel %vm1166, %v1150, %v989
        %v1168 = vsel %vm1166, %v1151, %v990
        %v1169 = vsel %vm1166, %v1152, %v991
        %v1170 = vsel %vm1166, %v1153, %v992
        %v1171 = vsel %vm1166, %v1154, %v993
        %v1172 = vsel %vm1166, %v1155, %v994
        %v1173 = vsel %vm1166, %v1156, %v995
        %v1174 = vsel %vm1166, %v1157, %v996
        %v1175 = vsel %vm1166, %v1158, %v997
        %v1176 = vsel %vm1166, %v1159, %v998
        %v1177 = vsel %vm1166, %v1160, %v999
        %v1178 = vsel %vm1166, %v1161, %v1000
        %v1179 = vsel %vm1166, %v1162, %v1001
        %v1180 = vsel %vm1166, %v1163, %v1002
        %v1181 = vsel %vm1166, %v1164, %v1003
        %v1182 = vsel %vm1166, %v1165, %v1004
        %vm1183 = vcmask 1042432
        %v1184 = vsel %vm1183, %v1167, %v1037
        %v1185 = vsel %vm1183, %v1168, %v1038
        %v1186 = vsel %vm1183, %v1169, %v1039
        %v1187 = vsel %vm1183, %v1170, %v1040
        %v1188 = vsel %vm1183, %v1171, %v1041
        %v1189 = vsel %vm1183, %v1172, %v1042
        %v1190 = vsel %vm1183, %v1173, %v1043
        %v1191 = vsel %vm1183, %v1174, %v1044
        %v1192 = vsel %vm1183, %v1175, %v1045
        %v1193 = vsel %vm1183, %v1176, %v1046
        %v1194 = vsel %vm1183, %v1177, %v1047
        %v1195 = vsel %vm1183, %v1178, %v1048
        %v1196 = vsel %vm1183, %v1179, %v1049
        %v1197 = vsel %vm1183, %v1180, %v1050
        %v1198 = vsel %vm1183, %v1181, %v1051
        %v1199 = vsel %vm1183, %v1182, %v1052
        %vm1200 = vcmask 1043456
        %v1201 = vsel %vm1200, %v1184, %v1085
        %v1202 = vsel %vm1200, %v1185, %v1086
        %v1203 = vsel %vm1200, %v1186, %v1087
        %v1204 = vsel %vm1200, %v1187, %v1088
        %v1205 = vsel %vm1200, %v1188, %v1089
        %v1206 = vsel %vm1200, %v1189, %v1090
        %v1207 = vsel %vm1200, %v1190, %v1091
        %v1208 = vsel %vm1200, %v1191, %v1092
        %v1209 = vsel %vm1200, %v1192, %v1093
        %v1210 = vsel %vm1200, %v1193, %v1094
        %v1211 = vsel %vm1200, %v1194, %v1095
        %v1212 = vsel %vm1200, %v1195, %v1096
        %v1213 = vsel %vm1200, %v1196, %v1097
        %v1214 = vsel %vm1200, %v1197, %v1098
        %v1215 = vsel %vm1200, %v1198, %v1099
        %v1216 = vsel %vm1200, %v1199, %v1100
        %vm1217 = vcmask 1044480
        %v1218 = vsel %vm1217, %v1201, %v156
        %v1219 = vsel %vm1217, %v1202, %v157
        %v1220 = vsel %vm1217, %v1203, %v158
        %v1221 = vsel %vm1217, %v1204, %v159
        %v1222 = vsel %vm1217, %v1205, %v160
        %v1223 = vsel %vm1217, %v1206, %v161
        %v1224 = vsel %vm1217, %v1207, %v162
        %v1225 = vsel %vm1217, %v1208, %v163
        %v1226 = vsel %vm1217, %v1209, %v164
        %v1227 = vsel %vm1217, %v1210, %v165
        %v1228 = vsel %vm1217, %v1211, %v166
        %v1229 = vsel %vm1217, %v1212, %v167
        %v1230 = vsel %vm1217, %v1213, %v168
        %v1231 = vsel %vm1217, %v1214, %v169
        %v1232 = vsel %vm1217, %v1215, %v170
        %v1233 = vsel %vm1217, %v1216, %v171
        %vm1234 = vcmask 1045504
        %v1235 = vsel %vm1234, %v1218, %v1117
        %v1236 = vsel %vm1234, %v1219, %v1118
        %v1237 = vsel %vm1234, %v1220, %v1119
        %v1238 = vsel %vm1234, %v1221, %v1120
        %v1239 = vsel %vm1234, %v1222, %v1121
        %v1240 = vsel %vm1234, %v1223, %v1122
        %v1241 = vsel %vm1234, %v1224, %v1123
        %v1242 = vsel %vm1234, %v1225, %v1124
        %v1243 = vsel %vm1234, %v1226, %v1125
        %v1244 = vsel %vm1234, %v1227, %v1126
        %v1245 = vsel %vm1234, %v1228, %v1127
        %v1246 = vsel %vm1234, %v1229, %v1128
        %v1247 = vsel %vm1234, %v1230, %v1129
        %v1248 = vsel %vm1234, %v1231, %v1130
        %v1249 = vsel %vm1234, %v1232, %v1131
        %v1250 = vsel %vm1234, %v1233, %v1132
        %vm1251 = vcmask 1046528
        %v1252 = vsel %vm1251, %v1235, 0.0
        %v1253 = vsel %vm1251, %v1236, 0.0
        %v1254 = vsel %vm1251, %v1237, 0.0
        %v1255 = vsel %vm1251, %v1238, 0.0
        %v1256 = vsel %vm1251, %v1239, 0.0
        %v1257 = vsel %vm1251, %v1240, 0.0
        %v1258 = vsel %vm1251, %v1241, 0.0
        %v1259 = vsel %vm1251, %v1242, 0.0
        %v1260 = vsel %vm1251, %v1243, 0.0
        %v1261 = vsel %vm1251, %v1244, 0.0
        %v1262 = vsel %vm1251, %v1245, 0.0
        %v1263 = vsel %vm1251, %v1246, 0.0
        %v1264 = vsel %vm1251, %v1247, 0.0
        %v1265 = vsel %vm1251, %v1248, 0.0
        %v1266 = vsel %vm1251, %v1249, 0.0
        %v1267 = vsel %vm1251, %v1250, 0.0
        %v1268 = vlaneseq
        %v1269 = vshrl.u32 %v1268, 7
        %v1270 = vadd.s32 %v1269, 8
        %v1271 = vadd.s32 %v1269, 16
        %v1272 = vadd.s32 %v1269, 24
        %v1273 = vlaneseq
        %v1274 = vshrl.u32 %v1273, 7
        %v1275 = vsub.s32 0, %v1274
        %v1276 = vrot.slane %v509, %v1275
        %v1277 = vlaneseq
        %v1278 = vshrl.u32 %v1277, 7
        %v1279 = vsub.s32 0, %v1278
        %v1280 = vrot.slane %v510, %v1279
        %v1281 = vlaneseq
        %v1282 = vshrl.u32 %v1281, 7
        %v1283 = vsub.s32 0, %v1282
        %v1284 = vrot.slane %v511, %v1283
        %v1285 = vlaneseq
        %v1286 = vshrl.u32 %v1285, 7
        %v1287 = vsub.s32 0, %v1286
        %v1288 = vrot.slane %v512, %v1287
        %v1289 = vlaneseq
        %v1290 = vshrl.u32 %v1289, 7
        %v1291 = vsub.s32 0, %v1290
        %v1292 = vrot.slane %v513, %v1291
        %v1293 = vlaneseq
        %v1294 = vshrl.u32 %v1293, 7
        %v1295 = vsub.s32 0, %v1294
        %v1296 = vrot.slane %v514, %v1295
        %v1297 = vlaneseq
        %v1298 = vshrl.u32 %v1297, 7
        %v1299 = vsub.s32 0, %v1298
        %v1300 = vrot.slane %v515, %v1299
        %v1301 = vlaneseq
        %v1302 = vshrl.u32 %v1301, 7
        %v1303 = vsub.s32 0, %v1302
        %v1304 = vrot.slane %v516, %v1303
        %v1305 = vlaneseq
        %v1306 = vshrl.u32 %v1305, 7
        %v1307 = vsub.s32 0, %v1306
        %v1308 = vrot.slane %v517, %v1307
        %v1309 = vlaneseq
        %v1310 = vshrl.u32 %v1309, 7
        %v1311 = vsub.s32 0, %v1310
        %v1312 = vrot.slane %v518, %v1311
        %v1313 = vlaneseq
        %v1314 = vshrl.u32 %v1313, 7
        %v1315 = vsub.s32 0, %v1314
        %v1316 = vrot.slane %v519, %v1315
        %v1317 = vlaneseq
        %v1318 = vshrl.u32 %v1317, 7
        %v1319 = vsub.s32 0, %v1318
        %v1320 = vrot.slane %v520, %v1319
        %v1321 = vlaneseq
        %v1322 = vshrl.u32 %v1321, 7
        %v1323 = vsub.s32 0, %v1322
        %v1324 = vrot.slane %v521, %v1323
        %v1325 = vlaneseq
        %v1326 = vshrl.u32 %v1325, 7
        %v1327 = vsub.s32 0, %v1326
        %v1328 = vrot.slane %v522, %v1327
        %v1329 = vlaneseq
        %v1330 = vshrl.u32 %v1329, 7
        %v1331 = vsub.s32 0, %v1330
        %v1332 = vrot.slane %v523, %v1331
        %v1333 = vlaneseq
        %v1334 = vshrl.u32 %v1333, 7
        %v1335 = vsub.s32 0, %v1334
        %v1336 = vrot.slane %v524, %v1335
        %vm1337 = vcmp.eq.s32.totalorder %v1269, %v1276
        %vm1338 = vcmp.eq.s32.totalorder %v1269, %v1280
        %vm1339 = vcmp.eq.s32.totalorder %v1269, %v1284
        %vm1340 = vcmp.eq.s32.totalorder %v1269, %v1288
        %vm1341 = vcmp.eq.s32.totalorder %v1269, %v1292
        %vm1342 = vcmp.eq.s32.totalorder %v1269, %v1296
        %vm1343 = vcmp.eq.s32.totalorder %v1269, %v1300
        %vm1344 = vcmp.eq.s32.totalorder %v1269, %v1304
        %vm1345 = vcmp.eq.s32.totalorder %v1269, %v1308
        %vm1346 = vcmp.eq.s32.totalorder %v1269, %v1312
        %vm1347 = vcmp.eq.s32.totalorder %v1269, %v1316
        %vm1348 = vcmp.eq.s32.totalorder %v1269, %v1320
        %vm1349 = vcmp.eq.s32.totalorder %v1269, %v1324
        %vm1350 = vcmp.eq.s32.totalorder %v1269, %v1328
        %vm1351 = vcmp.eq.s32.totalorder %v1269, %v1332
        %vm1352 = vcmp.eq.s32.totalorder %v1269, %v1336
        %vm1353 = vcmp.eq.s32.totalorder %v1270, %v1276
        %vm1354 = vcmp.eq.s32.totalorder %v1270, %v1280
        %vm1355 = vcmp.eq.s32.totalorder %v1270, %v1284
        %vm1356 = vcmp.eq.s32.totalorder %v1270, %v1288
        %vm1357 = vcmp.eq.s32.totalorder %v1270, %v1292
        %vm1358 = vcmp.eq.s32.totalorder %v1270, %v1296
        %vm1359 = vcmp.eq.s32.totalorder %v1270, %v1300
        %vm1360 = vcmp.eq.s32.totalorder %v1270, %v1304
        %vm1361 = vcmp.eq.s32.totalorder %v1270, %v1308
        %vm1362 = vcmp.eq.s32.totalorder %v1270, %v1312
        %vm1363 = vcmp.eq.s32.totalorder %v1270, %v1316
        %vm1364 = vcmp.eq.s32.totalorder %v1270, %v1320
        %vm1365 = vcmp.eq.s32.totalorder %v1270, %v1324
        %vm1366 = vcmp.eq.s32.totalorder %v1270, %v1328
        %vm1367 = vcmp.eq.s32.totalorder %v1270, %v1332
        %vm1368 = vcmp.eq.s32.totalorder %v1270, %v1336
        %vm1369 = vcmp.eq.s32.totalorder %v1271, %v1276
        %vm1370 = vcmp.eq.s32.totalorder %v1271, %v1280
        %vm1371 = vcmp.eq.s32.totalorder %v1271, %v1284
        %vm1372 = vcmp.eq.s32.totalorder %v1271, %v1288
        %vm1373 = vcmp.eq.s32.totalorder %v1271, %v1292
        %vm1374 = vcmp.eq.s32.totalorder %v1271, %v1296
        %vm1375 = vcmp.eq.s32.totalorder %v1271, %v1300
        %vm1376 = vcmp.eq.s32.totalorder %v1271, %v1304
        %vm1377 = vcmp.eq.s32.totalorder %v1271, %v1308
        %vm1378 = vcmp.eq.s32.totalorder %v1271, %v1312
        %vm1379 = vcmp.eq.s32.totalorder %v1271, %v1316
        %vm1380 = vcmp.eq.s32.totalorder %v1271, %v1320
        %vm1381 = vcmp.eq.s32.totalorder %v1271, %v1324
        %vm1382 = vcmp.eq.s32.totalorder %v1271, %v1328
        %vm1383 = vcmp.eq.s32.totalorder %v1271, %v1332
        %vm1384 = vcmp.eq.s32.totalorder %v1271, %v1336
        %vm1385 = vcmp.eq.s32.totalorder %v1272, %v1276
        %vm1386 = vcmp.eq.s32.totalorder %v1272, %v1280
        %vm1387 = vcmp.eq.s32.totalorder %v1272, %v1284
        %vm1388 = vcmp.eq.s32.totalorder %v1272, %v1288
        %vm1389 = vcmp.eq.s32.totalorder %v1272, %v1292
        %vm1390 = vcmp.eq.s32.totalorder %v1272, %v1296
        %vm1391 = vcmp.eq.s32.totalorder %v1272, %v1300
        %vm1392 = vcmp.eq.s32.totalorder %v1272, %v1304
        %vm1393 = vcmp.eq.s32.totalorder %v1272, %v1308
        %vm1394 = vcmp.eq.s32.totalorder %v1272, %v1312
        %vm1395 = vcmp.eq.s32.totalorder %v1272, %v1316
        %vm1396 = vcmp.eq.s32.totalorder %v1272, %v1320
        %vm1397 = vcmp.eq.s32.totalorder %v1272, %v1324
        %vm1398 = vcmp.eq.s32.totalorder %v1272, %v1328
        %vm1399 = vcmp.eq.s32.totalorder %v1272, %v1332
        %vm1400 = vcmp.eq.s32.totalorder %v1272, %v1336
        %v1401 = vlaneseq
        %v1402 = vshrl.u32 %v1401, 7
        %v1403 = vsub.s32 6, %v1402
        %v1404 = vrot.slane %v156, %v1403
        %v1405 = vlaneseq
        %v1406 = vshrl.u32 %v1405, 7
        %v1407 = vsub.s32 6, %v1406
        %v1408 = vrot.slane %v157, %v1407
        %v1409 = vlaneseq
        %v1410 = vshrl.u32 %v1409, 7
        %v1411 = vsub.s32 6, %v1410
        %v1412 = vrot.slane %v158, %v1411
        %v1413 = vlaneseq
        %v1414 = vshrl.u32 %v1413, 7
        %v1415 = vsub.s32 6, %v1414
        %v1416 = vrot.slane %v159, %v1415
        %v1417 = vlaneseq
        %v1418 = vshrl.u32 %v1417, 7
        %v1419 = vsub.s32 6, %v1418
        %v1420 = vrot.slane %v160, %v1419
        %v1421 = vlaneseq
        %v1422 = vshrl.u32 %v1421, 7
        %v1423 = vsub.s32 6, %v1422
        %v1424 = vrot.slane %v161, %v1423
        %v1425 = vlaneseq
        %v1426 = vshrl.u32 %v1425, 7
        %v1427 = vsub.s32 6, %v1426
        %v1428 = vrot.slane %v162, %v1427
        %v1429 = vlaneseq
        %v1430 = vshrl.u32 %v1429, 7
        %v1431 = vsub.s32 6, %v1430
        %v1432 = vrot.slane %v163, %v1431
        %v1433 = vlaneseq
        %v1434 = vshrl.u32 %v1433, 7
        %v1435 = vsub.s32 6, %v1434
        %v1436 = vrot.slane %v164, %v1435
        %v1437 = vlaneseq
        %v1438 = vshrl.u32 %v1437, 7
        %v1439 = vsub.s32 6, %v1438
        %v1440 = vrot.slane %v165, %v1439
        %v1441 = vlaneseq
        %v1442 = vshrl.u32 %v1441, 7
        %v1443 = vsub.s32 6, %v1442
        %v1444 = vrot.slane %v166, %v1443
        %v1445 = vlaneseq
        %v1446 = vshrl.u32 %v1445, 7
        %v1447 = vsub.s32 6, %v1446
        %v1448 = vrot.slane %v167, %v1447
        %v1449 = vlaneseq
        %v1450 = vshrl.u32 %v1449, 7
        %v1451 = vsub.s32 6, %v1450
        %v1452 = vrot.slane %v168, %v1451
        %v1453 = vlaneseq
        %v1454 = vshrl.u32 %v1453, 7
        %v1455 = vsub.s32 6, %v1454
        %v1456 = vrot.slane %v169, %v1455
        %v1457 = vlaneseq
        %v1458 = vshrl.u32 %v1457, 7
        %v1459 = vsub.s32 6, %v1458
        %v1460 = vrot.slane %v170, %v1459
        %v1461 = vlaneseq
        %v1462 = vshrl.u32 %v1461, 7
        %v1463 = vsub.s32 6, %v1462
        %v1464 = vrot.slane %v171, %v1463
        %v1465 = vsel %vm1337, %v1404, 0.0
        %v1466 = vsel %vm1338, %v1408, 0.0
        %v1467 = vsel %vm1339, %v1412, 0.0
        %v1468 = vsel %vm1340, %v1416, 0.0
        %v1469 = vsel %vm1341, %v1420, 0.0
        %v1470 = vsel %vm1342, %v1424, 0.0
        %v1471 = vsel %vm1343, %v1428, 0.0
        %v1472 = vsel %vm1344, %v1432, 0.0
        %v1473 = vsel %vm1345, %v1436, 0.0
        %v1474 = vsel %vm1346, %v1440, 0.0
        %v1475 = vsel %vm1347, %v1444, 0.0
        %v1476 = vsel %vm1348, %v1448, 0.0
        %v1477 = vsel %vm1349, %v1452, 0.0
        %v1478 = vsel %vm1350, %v1456, 0.0
        %v1479 = vsel %vm1351, %v1460, 0.0
        %v1480 = vsel %vm1352, %v1464, 0.0
        %v1481 = vsel %vm1353, %v1404, 0.0
        %v1482 = vsel %vm1354, %v1408, 0.0
        %v1483 = vsel %vm1355, %v1412, 0.0
        %v1484 = vsel %vm1356, %v1416, 0.0
        %v1485 = vsel %vm1357, %v1420, 0.0
        %v1486 = vsel %vm1358, %v1424, 0.0
        %v1487 = vsel %vm1359, %v1428, 0.0
        %v1488 = vsel %vm1360, %v1432, 0.0
        %v1489 = vsel %vm1361, %v1436, 0.0
        %v1490 = vsel %vm1362, %v1440, 0.0
        %v1491 = vsel %vm1363, %v1444, 0.0
        %v1492 = vsel %vm1364, %v1448, 0.0
        %v1493 = vsel %vm1365, %v1452, 0.0
        %v1494 = vsel %vm1366, %v1456, 0.0
        %v1495 = vsel %vm1367, %v1460, 0.0
        %v1496 = vsel %vm1368, %v1464, 0.0
        %v1497 = vsel %vm1369, %v1404, 0.0
        %v1498 = vsel %vm1370, %v1408, 0.0
        %v1499 = vsel %vm1371, %v1412, 0.0
        %v1500 = vsel %vm1372, %v1416, 0.0
        %v1501 = vsel %vm1373, %v1420, 0.0
        %v1502 = vsel %vm1374, %v1424, 0.0
        %v1503 = vsel %vm1375, %v1428, 0.0
        %v1504 = vsel %vm1376, %v1432, 0.0
        %v1505 = vsel %vm1377, %v1436, 0.0
        %v1506 = vsel %vm1378, %v1440, 0.0
        %v1507 = vsel %vm1379, %v1444, 0.0
        %v1508 = vsel %vm1380, %v1448, 0.0
        %v1509 = vsel %vm1381, %v1452, 0.0
        %v1510 = vsel %vm1382, %v1456, 0.0
        %v1511 = vsel %vm1383, %v1460, 0.0
        %v1512 = vsel %vm1384, %v1464, 0.0
        %v1513 = vsel %vm1385, %v1404, 0.0
        %v1514 = vsel %vm1386, %v1408, 0.0
        %v1515 = vsel %vm1387, %v1412, 0.0
        %v1516 = vsel %vm1388, %v1416, 0.0
        %v1517 = vsel %vm1389, %v1420, 0.0
        %v1518 = vsel %vm1390, %v1424, 0.0
        %v1519 = vsel %vm1391, %v1428, 0.0
        %v1520 = vsel %vm1392, %v1432, 0.0
        %v1521 = vsel %vm1393, %v1436, 0.0
        %v1522 = vsel %vm1394, %v1440, 0.0
        %v1523 = vsel %vm1395, %v1444, 0.0
        %v1524 = vsel %vm1396, %v1448, 0.0
        %v1525 = vsel %vm1397, %v1452, 0.0
        %v1526 = vsel %vm1398, %v1456, 0.0
        %v1527 = vsel %vm1399, %v1460, 0.0
        %v1528 = vsel %vm1400, %v1464, 0.0
        %v1529 = vld [vmem:[%s147] sm:$0xff]
        %1530 = vmatprep.subr.mxu0 0.0
        %1531 = vmatpush1.xpose.msra.mxu0 0.0
        %1532 = vmatprep.subr.mxu0 0.0
        %1533 = vmatpush1.xpose.msra.mxu0 0.0
        %1534 = vmatprep.subr.mxu0 0.0
        %1535 = vmatpush1.xpose.msra.mxu0 0.0
        %1536 = vmatprep.subr.mxu0 0.0
        %1537 = vmatpush1.xpose.msra.mxu0 0.0
        %1538 = vmatprep.subr.mxu0 0.0
        %1539 = vmatpush1.xpose.msra.mxu0 0.0
        %1540 = vmatprep.subr.mxu0 0.0
        %1541 = vmatpush1.xpose.msra.mxu0 0.0
        %1542 = vmatprep.subr.mxu0 0.0
        %1543 = vmatpush1.xpose.msra.mxu0 0.0
        %1544 = vmatprep.subr.mxu0 0.0
        %1545 = vmatpush1.xpose.msra.mxu0 0.0
        %1546 = vmatprep.subr.mxu0 0.0
        %1547 = vmatpush1.xpose.msra.mxu0 0.0
        %1548 = vmatprep.subr.mxu0 0.0
        %1549 = vmatpush1.xpose.msra.mxu0 0.0
        %1550 = vmatprep.subr.mxu0 0.0
        %1551 = vmatpush1.xpose.msra.mxu0 0.0
        %1552 = vmatprep.subr.mxu0 0.0
        %1553 = vmatpush1.xpose.msra.mxu0 0.0
        %1554 = vmatprep.subr.mxu0 %v1514
        %1555 = vmatpush1.xpose.msra.mxu0 %v1513
        %1556 = vmatprep.subr.mxu0 %v1498
        %1557 = vmatpush1.xpose.msra.mxu0 %v1497
        %1558 = vmatprep.subr.mxu0 %v1482
        %1559 = vmatpush1.xpose.msra.mxu0 %v1481
        %1560 = vmatprep.subr.mxu0 %v1466
        %1561 = vmatpush1.xpose.msra.mxu0 %v1465
        %1562 = vmatprep.subr.mxu0 0.0
        %1563 = vmatpush2.xpose.msra.mxu0 0.0
        %1564 = vmatprep.subr.mxu0 0.0
        %1565 = vmatpush2.xpose.msra.mxu0 0.0
        %1566 = vmatprep.subr.mxu0 0.0
        %1567 = vmatpush2.xpose.msra.mxu0 0.0
        %1568 = vmatprep.subr.mxu0 0.0
        %1569 = vmatpush2.xpose.msra.mxu0 0.0
        %1570 = vmatprep.subr.mxu0 0.0
        %1571 = vmatpush2.xpose.msra.mxu0 0.0
        %1572 = vmatprep.subr.mxu0 0.0
        %1573 = vmatpush2.xpose.msra.mxu0 0.0
        %1574 = vmatprep.subr.mxu0 0.0
        %1575 = vmatpush2.xpose.msra.mxu0 0.0
        %1576 = vmatprep.subr.mxu0 0.0
        %1577 = vmatpush2.xpose.msra.mxu0 0.0
        %1578 = vmatprep.subr.mxu0 0.0
        %1579 = vmatpush2.xpose.msra.mxu0 0.0
        %1580 = vmatprep.subr.mxu0 0.0
        %1581 = vmatpush2.xpose.msra.mxu0 0.0
        %1582 = vmatprep.subr.mxu0 0.0
        %1583 = vmatpush2.xpose.msra.mxu0 0.0
        %1584 = vmatprep.subr.mxu0 0.0
        %1585 = vmatpush2.xpose.msra.mxu0 0.0
        %1586 = vmatprep.subr.mxu0 0.0
        %1587 = vmatpush2.xpose.msra.mxu0 0.0
        %1588 = vmatprep.subr.mxu0 0.0
        %1589 = vmatpush2.xpose.msra.mxu0 0.0
        %1590 = vmatprep.subr.mxu0 0.0
        %1591 = vmatpush2.xpose.msra.mxu0 0.0
        %1592 = vmatprep.subr.mxu0 0.0
        %1593 = vmatpush2.xpose.msra.mxu0 0.0
        %1594 = vmatprep.mubr.f32.mxu0 %v1253
        %1595 = vmatmul.mubr.f32.gmra.mxu0 %v1252
        %v1596 = vpop.f32.mrf.mxu0
        %v1597 = vadd.f32 0.0, %v1596
        %v1598 = vpop.f32.mrf.mxu0
        %1599 = vdwg.mxu0
        %1600 = vmatprep.subr.mxu0 0.0
        %1601 = vmatpush1.xpose.msra.mxu0 0.0
        %1602 = vmatprep.subr.mxu0 0.0
        %1603 = vmatpush1.xpose.msra.mxu0 0.0
        %1604 = vmatprep.subr.mxu0 0.0
        %1605 = vmatpush1.xpose.msra.mxu0 0.0
        %1606 = vmatprep.subr.mxu0 0.0
        %1607 = vmatpush1.xpose.msra.mxu0 0.0
        %1608 = vmatprep.subr.mxu0 0.0
        %1609 = vmatpush1.xpose.msra.mxu0 0.0
        %1610 = vmatprep.subr.mxu0 0.0
        %1611 = vmatpush1.xpose.msra.mxu0 0.0
        %1612 = vmatprep.subr.mxu0 0.0
        %1613 = vmatpush1.xpose.msra.mxu0 0.0
        %1614 = vmatprep.subr.mxu0 0.0
        %1615 = vmatpush1.xpose.msra.mxu0 0.0
        %1616 = vmatprep.subr.mxu0 0.0
        %1617 = vmatpush1.xpose.msra.mxu0 0.0
        %1618 = vmatprep.subr.mxu0 0.0
        %1619 = vmatpush1.xpose.msra.mxu0 0.0
        %1620 = vmatprep.subr.mxu0 0.0
        %1621 = vmatpush1.xpose.msra.mxu0 0.0
        %1622 = vmatprep.subr.mxu0 0.0
        %1623 = vmatpush1.xpose.msra.mxu0 0.0
        %1624 = vmatprep.subr.mxu0 %v1516
        %1625 = vmatpush1.xpose.msra.mxu0 %v1515
        %1626 = vmatprep.subr.mxu0 %v1500
        %1627 = vmatpush1.xpose.msra.mxu0 %v1499
        %1628 = vmatprep.subr.mxu0 %v1484
        %1629 = vmatpush1.xpose.msra.mxu0 %v1483
        %1630 = vmatprep.subr.mxu0 %v1468
        %1631 = vmatpush1.xpose.msra.mxu0 %v1467
        %1632 = vmatprep.subr.mxu0 0.0
        %1633 = vmatpush2.xpose.msra.mxu0 0.0
        %1634 = vmatprep.subr.mxu0 0.0
        %1635 = vmatpush2.xpose.msra.mxu0 0.0
        %1636 = vmatprep.subr.mxu0 0.0
        %1637 = vmatpush2.xpose.msra.mxu0 0.0
        %1638 = vmatprep.subr.mxu0 0.0
        %1639 = vmatpush2.xpose.msra.mxu0 0.0
        %1640 = vmatprep.subr.mxu0 0.0
        %1641 = vmatpush2.xpose.msra.mxu0 0.0
        %1642 = vmatprep.subr.mxu0 0.0
        %1643 = vmatpush2.xpose.msra.mxu0 0.0
        %1644 = vmatprep.subr.mxu0 0.0
        %1645 = vmatpush2.xpose.msra.mxu0 0.0
        %1646 = vmatprep.subr.mxu0 0.0
        %1647 = vmatpush2.xpose.msra.mxu0 0.0
        %1648 = vmatprep.subr.mxu0 0.0
        %1649 = vmatpush2.xpose.msra.mxu0 0.0
        %1650 = vmatprep.subr.mxu0 0.0
        %1651 = vmatpush2.xpose.msra.mxu0 0.0
        %1652 = vmatprep.subr.mxu0 0.0
        %1653 = vmatpush2.xpose.msra.mxu0 0.0
        %1654 = vmatprep.subr.mxu0 0.0
        %1655 = vmatpush2.xpose.msra.mxu0 0.0
        %1656 = vmatprep.subr.mxu0 0.0
        %1657 = vmatpush2.xpose.msra.mxu0 0.0
        %1658 = vmatprep.subr.mxu0 0.0
        %1659 = vmatpush2.xpose.msra.mxu0 0.0
        %1660 = vmatprep.subr.mxu0 0.0
        %1661 = vmatpush2.xpose.msra.mxu0 0.0
        %1662 = vmatprep.subr.mxu0 0.0
        %1663 = vmatpush2.xpose.msra.mxu0 0.0
        %1664 = vmatprep.mubr.f32.mxu0 %v1255
        %1665 = vmatmul.mubr.f32.gmra.mxu0 %v1254
        %v1666 = vpop.f32.mrf.mxu0
        %v1667 = vadd.f32 %v1597, %v1666
        %v1668 = vpop.f32.mrf.mxu0
        %1669 = vdwg.mxu0
        %1670 = vmatprep.subr.mxu0 0.0
        %1671 = vmatpush1.xpose.msra.mxu0 0.0
        %1672 = vmatprep.subr.mxu0 0.0
        %1673 = vmatpush1.xpose.msra.mxu0 0.0
        %1674 = vmatprep.subr.mxu0 0.0
        %1675 = vmatpush1.xpose.msra.mxu0 0.0
        %1676 = vmatprep.subr.mxu0 0.0
        %1677 = vmatpush1.xpose.msra.mxu0 0.0
        %1678 = vmatprep.subr.mxu0 0.0
        %1679 = vmatpush1.xpose.msra.mxu0 0.0
        %1680 = vmatprep.subr.mxu0 0.0
        %1681 = vmatpush1.xpose.msra.mxu0 0.0
        %1682 = vmatprep.subr.mxu0 0.0
        %1683 = vmatpush1.xpose.msra.mxu0 0.0
        %1684 = vmatprep.subr.mxu0 0.0
        %1685 = vmatpush1.xpose.msra.mxu0 0.0
        %1686 = vmatprep.subr.mxu0 0.0
        %1687 = vmatpush1.xpose.msra.mxu0 0.0
        %1688 = vmatprep.subr.mxu0 0.0
        %1689 = vmatpush1.xpose.msra.mxu0 0.0
        %1690 = vmatprep.subr.mxu0 0.0
        %1691 = vmatpush1.xpose.msra.mxu0 0.0
        %1692 = vmatprep.subr.mxu0 0.0
        %1693 = vmatpush1.xpose.msra.mxu0 0.0
        %1694 = vmatprep.subr.mxu0 %v1518
        %1695 = vmatpush1.xpose.msra.mxu0 %v1517
        %1696 = vmatprep.subr.mxu0 %v1502
        %1697 = vmatpush1.xpose.msra.mxu0 %v1501
        %1698 = vmatprep.subr.mxu0 %v1486
        %1699 = vmatpush1.xpose.msra.mxu0 %v1485
        %1700 = vmatprep.subr.mxu0 %v1470
        %1701 = vmatpush1.xpose.msra.mxu0 %v1469
        %1702 = vmatprep.subr.mxu0 0.0
        %1703 = vmatpush2.xpose.msra.mxu0 0.0
        %1704 = vmatprep.subr.mxu0 0.0
        %1705 = vmatpush2.xpose.msra.mxu0 0.0
        %1706 = vmatprep.subr.mxu0 0.0
        %1707 = vmatpush2.xpose.msra.mxu0 0.0
        %1708 = vmatprep.subr.mxu0 0.0
        %1709 = vmatpush2.xpose.msra.mxu0 0.0
        %1710 = vmatprep.subr.mxu0 0.0
        %1711 = vmatpush2.xpose.msra.mxu0 0.0
        %1712 = vmatprep.subr.mxu0 0.0
        %1713 = vmatpush2.xpose.msra.mxu0 0.0
        %1714 = vmatprep.subr.mxu0 0.0
        %1715 = vmatpush2.xpose.msra.mxu0 0.0
        %1716 = vmatprep.subr.mxu0 0.0
        %1717 = vmatpush2.xpose.msra.mxu0 0.0
        %1718 = vmatprep.subr.mxu0 0.0
        %1719 = vmatpush2.xpose.msra.mxu0 0.0
        %1720 = vmatprep.subr.mxu0 0.0
        %1721 = vmatpush2.xpose.msra.mxu0 0.0
        %1722 = vmatprep.subr.mxu0 0.0
        %1723 = vmatpush2.xpose.msra.mxu0 0.0
        %1724 = vmatprep.subr.mxu0 0.0
        %1725 = vmatpush2.xpose.msra.mxu0 0.0
        %1726 = vmatprep.subr.mxu0 0.0
        %1727 = vmatpush2.xpose.msra.mxu0 0.0
        %1728 = vmatprep.subr.mxu0 0.0
        %1729 = vmatpush2.xpose.msra.mxu0 0.0
        %1730 = vmatprep.subr.mxu0 0.0
        %1731 = vmatpush2.xpose.msra.mxu0 0.0
        %1732 = vmatprep.subr.mxu0 0.0
        %1733 = vmatpush2.xpose.msra.mxu0 0.0
        %1734 = vmatprep.mubr.f32.mxu0 %v1257
        %1735 = vmatmul.mubr.f32.gmra.mxu0 %v1256
        %v1736 = vpop.f32.mrf.mxu0
        %v1737 = vadd.f32 %v1667, %v1736
        %v1738 = vpop.f32.mrf.mxu0
        %1739 = vdwg.mxu0
        %1740 = vmatprep.subr.mxu0 0.0
        %1741 = vmatpush1.xpose.msra.mxu0 0.0
        %1742 = vmatprep.subr.mxu0 0.0
        %1743 = vmatpush1.xpose.msra.mxu0 0.0
        %1744 = vmatprep.subr.mxu0 0.0
        %1745 = vmatpush1.xpose.msra.mxu0 0.0
        %1746 = vmatprep.subr.mxu0 0.0
        %1747 = vmatpush1.xpose.msra.mxu0 0.0
        %1748 = vmatprep.subr.mxu0 0.0
        %1749 = vmatpush1.xpose.msra.mxu0 0.0
        %1750 = vmatprep.subr.mxu0 0.0
        %1751 = vmatpush1.xpose.msra.mxu0 0.0
        %1752 = vmatprep.subr.mxu0 0.0
        %1753 = vmatpush1.xpose.msra.mxu0 0.0
        %1754 = vmatprep.subr.mxu0 0.0
        %1755 = vmatpush1.xpose.msra.mxu0 0.0
        %1756 = vmatprep.subr.mxu0 0.0
        %1757 = vmatpush1.xpose.msra.mxu0 0.0
        %1758 = vmatprep.subr.mxu0 0.0
        %1759 = vmatpush1.xpose.msra.mxu0 0.0
        %1760 = vmatprep.subr.mxu0 0.0
        %1761 = vmatpush1.xpose.msra.mxu0 0.0
        %1762 = vmatprep.subr.mxu0 0.0
        %1763 = vmatpush1.xpose.msra.mxu0 0.0
        %1764 = vmatprep.subr.mxu0 %v1520
        %1765 = vmatpush1.xpose.msra.mxu0 %v1519
        %1766 = vmatprep.subr.mxu0 %v1504
        %1767 = vmatpush1.xpose.msra.mxu0 %v1503
        %1768 = vmatprep.subr.mxu0 %v1488
        %1769 = vmatpush1.xpose.msra.mxu0 %v1487
        %1770 = vmatprep.subr.mxu0 %v1472
        %1771 = vmatpush1.xpose.msra.mxu0 %v1471
        %1772 = vmatprep.subr.mxu0 0.0
        %1773 = vmatpush2.xpose.msra.mxu0 0.0
        %1774 = vmatprep.subr.mxu0 0.0
        %1775 = vmatpush2.xpose.msra.mxu0 0.0
        %1776 = vmatprep.subr.mxu0 0.0
        %1777 = vmatpush2.xpose.msra.mxu0 0.0
        %1778 = vmatprep.subr.mxu0 0.0
        %1779 = vmatpush2.xpose.msra.mxu0 0.0
        %1780 = vmatprep.subr.mxu0 0.0
        %1781 = vmatpush2.xpose.msra.mxu0 0.0
        %1782 = vmatprep.subr.mxu0 0.0
        %1783 = vmatpush2.xpose.msra.mxu0 0.0
        %1784 = vmatprep.subr.mxu0 0.0
        %1785 = vmatpush2.xpose.msra.mxu0 0.0
        %1786 = vmatprep.subr.mxu0 0.0
        %1787 = vmatpush2.xpose.msra.mxu0 0.0
        %1788 = vmatprep.subr.mxu0 0.0
        %1789 = vmatpush2.xpose.msra.mxu0 0.0
        %1790 = vmatprep.subr.mxu0 0.0
        %1791 = vmatpush2.xpose.msra.mxu0 0.0
        %1792 = vmatprep.subr.mxu0 0.0
        %1793 = vmatpush2.xpose.msra.mxu0 0.0
        %1794 = vmatprep.subr.mxu0 0.0
        %1795 = vmatpush2.xpose.msra.mxu0 0.0
        %1796 = vmatprep.subr.mxu0 0.0
        %1797 = vmatpush2.xpose.msra.mxu0 0.0
        %1798 = vmatprep.subr.mxu0 0.0
        %1799 = vmatpush2.xpose.msra.mxu0 0.0
        %1800 = vmatprep.subr.mxu0 0.0
        %1801 = vmatpush2.xpose.msra.mxu0 0.0
        %1802 = vmatprep.subr.mxu0 0.0
        %1803 = vmatpush2.xpose.msra.mxu0 0.0
        %1804 = vmatprep.mubr.f32.mxu0 %v1259
        %1805 = vmatmul.mubr.f32.gmra.mxu0 %v1258
        %v1806 = vpop.f32.mrf.mxu0
        %v1807 = vadd.f32 %v1737, %v1806
        %v1808 = vpop.f32.mrf.mxu0
        %1809 = vdwg.mxu0
        %1810 = vmatprep.subr.mxu0 0.0
        %1811 = vmatpush1.xpose.msra.mxu0 0.0
        %1812 = vmatprep.subr.mxu0 0.0
        %1813 = vmatpush1.xpose.msra.mxu0 0.0
        %1814 = vmatprep.subr.mxu0 0.0
        %1815 = vmatpush1.xpose.msra.mxu0 0.0
        %1816 = vmatprep.subr.mxu0 0.0
        %1817 = vmatpush1.xpose.msra.mxu0 0.0
        %1818 = vmatprep.subr.mxu0 0.0
        %1819 = vmatpush1.xpose.msra.mxu0 0.0
        %1820 = vmatprep.subr.mxu0 0.0
        %1821 = vmatpush1.xpose.msra.mxu0 0.0
        %1822 = vmatprep.subr.mxu0 0.0
        %1823 = vmatpush1.xpose.msra.mxu0 0.0
        %1824 = vmatprep.subr.mxu0 0.0
        %1825 = vmatpush1.xpose.msra.mxu0 0.0
        %1826 = vmatprep.subr.mxu0 0.0
        %1827 = vmatpush1.xpose.msra.mxu0 0.0
        %1828 = vmatprep.subr.mxu0 0.0
        %1829 = vmatpush1.xpose.msra.mxu0 0.0
        %1830 = vmatprep.subr.mxu0 0.0
        %1831 = vmatpush1.xpose.msra.mxu0 0.0
        %1832 = vmatprep.subr.mxu0 0.0
        %1833 = vmatpush1.xpose.msra.mxu0 0.0
        %1834 = vmatprep.subr.mxu0 %v1522
        %1835 = vmatpush1.xpose.msra.mxu0 %v1521
        %1836 = vmatprep.subr.mxu0 %v1506
        %1837 = vmatpush1.xpose.msra.mxu0 %v1505
        %1838 = vmatprep.subr.mxu0 %v1490
        %1839 = vmatpush1.xpose.msra.mxu0 %v1489
        %1840 = vmatprep.subr.mxu0 %v1474
        %1841 = vmatpush1.xpose.msra.mxu0 %v1473
        %1842 = vmatprep.subr.mxu0 0.0
        %1843 = vmatpush2.xpose.msra.mxu0 0.0
        %1844 = vmatprep.subr.mxu0 0.0
        %1845 = vmatpush2.xpose.msra.mxu0 0.0
        %1846 = vmatprep.subr.mxu0 0.0
        %1847 = vmatpush2.xpose.msra.mxu0 0.0
        %1848 = vmatprep.subr.mxu0 0.0
        %1849 = vmatpush2.xpose.msra.mxu0 0.0
        %1850 = vmatprep.subr.mxu0 0.0
        %1851 = vmatpush2.xpose.msra.mxu0 0.0
        %1852 = vmatprep.subr.mxu0 0.0
        %1853 = vmatpush2.xpose.msra.mxu0 0.0
        %1854 = vmatprep.subr.mxu0 0.0
        %1855 = vmatpush2.xpose.msra.mxu0 0.0
        %1856 = vmatprep.subr.mxu0 0.0
        %1857 = vmatpush2.xpose.msra.mxu0 0.0
        %1858 = vmatprep.subr.mxu0 0.0
        %1859 = vmatpush2.xpose.msra.mxu0 0.0
        %1860 = vmatprep.subr.mxu0 0.0
        %1861 = vmatpush2.xpose.msra.mxu0 0.0
        %1862 = vmatprep.subr.mxu0 0.0
        %1863 = vmatpush2.xpose.msra.mxu0 0.0
        %1864 = vmatprep.subr.mxu0 0.0
        %1865 = vmatpush2.xpose.msra.mxu0 0.0
        %1866 = vmatprep.subr.mxu0 0.0
        %1867 = vmatpush2.xpose.msra.mxu0 0.0
        %1868 = vmatprep.subr.mxu0 0.0
        %1869 = vmatpush2.xpose.msra.mxu0 0.0
        %1870 = vmatprep.subr.mxu0 0.0
        %1871 = vmatpush2.xpose.msra.mxu0 0.0
        %1872 = vmatprep.subr.mxu0 0.0
        %1873 = vmatpush2.xpose.msra.mxu0 0.0
        %1874 = vmatprep.mubr.f32.mxu0 %v1261
        %1875 = vmatmul.mubr.f32.gmra.mxu0 %v1260
        %v1876 = vpop.f32.mrf.mxu0
        %v1877 = vadd.f32 %v1807, %v1876
        %v1878 = vpop.f32.mrf.mxu0
        %1879 = vdwg.mxu0
        %1880 = vmatprep.subr.mxu0 0.0
        %1881 = vmatpush1.xpose.msra.mxu0 0.0
        %1882 = vmatprep.subr.mxu0 0.0
        %1883 = vmatpush1.xpose.msra.mxu0 0.0
        %1884 = vmatprep.subr.mxu0 0.0
        %1885 = vmatpush1.xpose.msra.mxu0 0.0
        %1886 = vmatprep.subr.mxu0 0.0
        %1887 = vmatpush1.xpose.msra.mxu0 0.0
        %1888 = vmatprep.subr.mxu0 0.0
        %1889 = vmatpush1.xpose.msra.mxu0 0.0
        %1890 = vmatprep.subr.mxu0 0.0
        %1891 = vmatpush1.xpose.msra.mxu0 0.0
        %1892 = vmatprep.subr.mxu0 0.0
        %1893 = vmatpush1.xpose.msra.mxu0 0.0
        %1894 = vmatprep.subr.mxu0 0.0
        %1895 = vmatpush1.xpose.msra.mxu0 0.0
        %1896 = vmatprep.subr.mxu0 0.0
        %1897 = vmatpush1.xpose.msra.mxu0 0.0
        %1898 = vmatprep.subr.mxu0 0.0
        %1899 = vmatpush1.xpose.msra.mxu0 0.0
        %1900 = vmatprep.subr.mxu0 0.0
        %1901 = vmatpush1.xpose.msra.mxu0 0.0
        %1902 = vmatprep.subr.mxu0 0.0
        %1903 = vmatpush1.xpose.msra.mxu0 0.0
        %1904 = vmatprep.subr.mxu0 %v1524
        %1905 = vmatpush1.xpose.msra.mxu0 %v1523
        %1906 = vmatprep.subr.mxu0 %v1508
        %1907 = vmatpush1.xpose.msra.mxu0 %v1507
        %1908 = vmatprep.subr.mxu0 %v1492
        %1909 = vmatpush1.xpose.msra.mxu0 %v1491
        %1910 = vmatprep.subr.mxu0 %v1476
        %1911 = vmatpush1.xpose.msra.mxu0 %v1475
        %1912 = vmatprep.subr.mxu0 0.0
        %1913 = vmatpush2.xpose.msra.mxu0 0.0
        %1914 = vmatprep.subr.mxu0 0.0
        %1915 = vmatpush2.xpose.msra.mxu0 0.0
        %1916 = vmatprep.subr.mxu0 0.0
        %1917 = vmatpush2.xpose.msra.mxu0 0.0
        %1918 = vmatprep.subr.mxu0 0.0
        %1919 = vmatpush2.xpose.msra.mxu0 0.0
        %1920 = vmatprep.subr.mxu0 0.0
        %1921 = vmatpush2.xpose.msra.mxu0 0.0
        %1922 = vmatprep.subr.mxu0 0.0
        %1923 = vmatpush2.xpose.msra.mxu0 0.0
        %1924 = vmatprep.subr.mxu0 0.0
        %1925 = vmatpush2.xpose.msra.mxu0 0.0
        %1926 = vmatprep.subr.mxu0 0.0
        %1927 = vmatpush2.xpose.msra.mxu0 0.0
        %1928 = vmatprep.subr.mxu0 0.0
        %1929 = vmatpush2.xpose.msra.mxu0 0.0
        %1930 = vmatprep.subr.mxu0 0.0
        %1931 = vmatpush2.xpose.msra.mxu0 0.0
        %1932 = vmatprep.subr.mxu0 0.0
        %1933 = vmatpush2.xpose.msra.mxu0 0.0
        %1934 = vmatprep.subr.mxu0 0.0
        %1935 = vmatpush2.xpose.msra.mxu0 0.0
        %1936 = vmatprep.subr.mxu0 0.0
        %1937 = vmatpush2.xpose.msra.mxu0 0.0
        %1938 = vmatprep.subr.mxu0 0.0
        %1939 = vmatpush2.xpose.msra.mxu0 0.0
        %1940 = vmatprep.subr.mxu0 0.0
        %1941 = vmatpush2.xpose.msra.mxu0 0.0
        %1942 = vmatprep.subr.mxu0 0.0
        %1943 = vmatpush2.xpose.msra.mxu0 0.0
        %1944 = vmatprep.mubr.f32.mxu0 %v1263
        %1945 = vmatmul.mubr.f32.gmra.mxu0 %v1262
        %v1946 = vpop.f32.mrf.mxu0
        %v1947 = vadd.f32 %v1877, %v1946
        %v1948 = vpop.f32.mrf.mxu0
        %1949 = vdwg.mxu0
        %1950 = vmatprep.subr.mxu0 0.0
        %1951 = vmatpush1.xpose.msra.mxu0 0.0
        %1952 = vmatprep.subr.mxu0 0.0
        %1953 = vmatpush1.xpose.msra.mxu0 0.0
        %1954 = vmatprep.subr.mxu0 0.0
        %1955 = vmatpush1.xpose.msra.mxu0 0.0
        %1956 = vmatprep.subr.mxu0 0.0
        %1957 = vmatpush1.xpose.msra.mxu0 0.0
        %1958 = vmatprep.subr.mxu0 0.0
        %1959 = vmatpush1.xpose.msra.mxu0 0.0
        %1960 = vmatprep.subr.mxu0 0.0
        %1961 = vmatpush1.xpose.msra.mxu0 0.0
        %1962 = vmatprep.subr.mxu0 0.0
        %1963 = vmatpush1.xpose.msra.mxu0 0.0
        %1964 = vmatprep.subr.mxu0 0.0
        %1965 = vmatpush1.xpose.msra.mxu0 0.0
        %1966 = vmatprep.subr.mxu0 0.0
        %1967 = vmatpush1.xpose.msra.mxu0 0.0
        %1968 = vmatprep.subr.mxu0 0.0
        %1969 = vmatpush1.xpose.msra.mxu0 0.0
        %1970 = vmatprep.subr.mxu0 0.0
        %1971 = vmatpush1.xpose.msra.mxu0 0.0
        %1972 = vmatprep.subr.mxu0 0.0
        %1973 = vmatpush1.xpose.msra.mxu0 0.0
        %1974 = vmatprep.subr.mxu0 %v1526
        %1975 = vmatpush1.xpose.msra.mxu0 %v1525
        %1976 = vmatprep.subr.mxu0 %v1510
        %1977 = vmatpush1.xpose.msra.mxu0 %v1509
        %1978 = vmatprep.subr.mxu0 %v1494
        %1979 = vmatpush1.xpose.msra.mxu0 %v1493
        %1980 = vmatprep.subr.mxu0 %v1478
        %1981 = vmatpush1.xpose.msra.mxu0 %v1477
        %1982 = vmatprep.subr.mxu0 0.0
        %1983 = vmatpush2.xpose.msra.mxu0 0.0
        %1984 = vmatprep.subr.mxu0 0.0
        %1985 = vmatpush2.xpose.msra.mxu0 0.0
        %1986 = vmatprep.subr.mxu0 0.0
        %1987 = vmatpush2.xpose.msra.mxu0 0.0
        %1988 = vmatprep.subr.mxu0 0.0
        %1989 = vmatpush2.xpose.msra.mxu0 0.0
        %1990 = vmatprep.subr.mxu0 0.0
        %1991 = vmatpush2.xpose.msra.mxu0 0.0
        %1992 = vmatprep.subr.mxu0 0.0
        %1993 = vmatpush2.xpose.msra.mxu0 0.0
        %1994 = vmatprep.subr.mxu0 0.0
        %1995 = vmatpush2.xpose.msra.mxu0 0.0
        %1996 = vmatprep.subr.mxu0 0.0
        %1997 = vmatpush2.xpose.msra.mxu0 0.0
        %1998 = vmatprep.subr.mxu0 0.0
        %1999 = vmatpush2.xpose.msra.mxu0 0.0
        %2000 = vmatprep.subr.mxu0 0.0
        %2001 = vmatpush2.xpose.msra.mxu0 0.0
        %2002 = vmatprep.subr.mxu0 0.0
        %2003 = vmatpush2.xpose.msra.mxu0 0.0
        %2004 = vmatprep.subr.mxu0 0.0
        %2005 = vmatpush2.xpose.msra.mxu0 0.0
        %2006 = vmatprep.subr.mxu0 0.0
        %2007 = vmatpush2.xpose.msra.mxu0 0.0
        %2008 = vmatprep.subr.mxu0 0.0
        %2009 = vmatpush2.xpose.msra.mxu0 0.0
        %2010 = vmatprep.subr.mxu0 0.0
        %2011 = vmatpush2.xpose.msra.mxu0 0.0
        %2012 = vmatprep.subr.mxu0 0.0
        %2013 = vmatpush2.xpose.msra.mxu0 0.0
        %2014 = vmatprep.mubr.f32.mxu0 %v1265
        %2015 = vmatmul.mubr.f32.gmra.mxu0 %v1264
        %v2016 = vpop.f32.mrf.mxu0
        %v2017 = vadd.f32 %v1947, %v2016
        %v2018 = vpop.f32.mrf.mxu0
        %2019 = vdwg.mxu0
        %2020 = vmatprep.subr.mxu0 0.0
        %2021 = vmatpush1.xpose.msra.mxu0 0.0
        %2022 = vmatprep.subr.mxu0 0.0
        %2023 = vmatpush1.xpose.msra.mxu0 0.0
        %2024 = vmatprep.subr.mxu0 0.0
        %2025 = vmatpush1.xpose.msra.mxu0 0.0
        %2026 = vmatprep.subr.mxu0 0.0
        %2027 = vmatpush1.xpose.msra.mxu0 0.0
        %2028 = vmatprep.subr.mxu0 0.0
        %2029 = vmatpush1.xpose.msra.mxu0 0.0
        %2030 = vmatprep.subr.mxu0 0.0
        %2031 = vmatpush1.xpose.msra.mxu0 0.0
        %2032 = vmatprep.subr.mxu0 0.0
        %2033 = vmatpush1.xpose.msra.mxu0 0.0
        %2034 = vmatprep.subr.mxu0 0.0
        %2035 = vmatpush1.xpose.msra.mxu0 0.0
        %2036 = vmatprep.subr.mxu0 0.0
        %2037 = vmatpush1.xpose.msra.mxu0 0.0
        %2038 = vmatprep.subr.mxu0 0.0
        %2039 = vmatpush1.xpose.msra.mxu0 0.0
        %2040 = vmatprep.subr.mxu0 0.0
        %2041 = vmatpush1.xpose.msra.mxu0 0.0
        %2042 = vmatprep.subr.mxu0 0.0
        %2043 = vmatpush1.xpose.msra.mxu0 0.0
        %2044 = vmatprep.subr.mxu0 %v1528
        %2045 = vmatpush1.xpose.msra.mxu0 %v1527
        %2046 = vmatprep.subr.mxu0 %v1512
        %2047 = vmatpush1.xpose.msra.mxu0 %v1511
        %2048 = vmatprep.subr.mxu0 %v1496
        %2049 = vmatpush1.xpose.msra.mxu0 %v1495
        %2050 = vmatprep.subr.mxu0 %v1480
        %2051 = vmatpush1.xpose.msra.mxu0 %v1479
        %2052 = vmatprep.subr.mxu0 0.0
        %2053 = vmatpush2.xpose.msra.mxu0 0.0
        %2054 = vmatprep.subr.mxu0 0.0
        %2055 = vmatpush2.xpose.msra.mxu0 0.0
        %2056 = vmatprep.subr.mxu0 0.0
        %2057 = vmatpush2.xpose.msra.mxu0 0.0
        %2058 = vmatprep.subr.mxu0 0.0
        %2059 = vmatpush2.xpose.msra.mxu0 0.0
        %2060 = vmatprep.subr.mxu0 0.0
        %2061 = vmatpush2.xpose.msra.mxu0 0.0
        %2062 = vmatprep.subr.mxu0 0.0
        %2063 = vmatpush2.xpose.msra.mxu0 0.0
        %2064 = vmatprep.subr.mxu0 0.0
        %2065 = vmatpush2.xpose.msra.mxu0 0.0
        %2066 = vmatprep.subr.mxu0 0.0
        %2067 = vmatpush2.xpose.msra.mxu0 0.0
        %2068 = vmatprep.subr.mxu0 0.0
        %2069 = vmatpush2.xpose.msra.mxu0 0.0
        %2070 = vmatprep.subr.mxu0 0.0
        %2071 = vmatpush2.xpose.msra.mxu0 0.0
        %2072 = vmatprep.subr.mxu0 0.0
        %2073 = vmatpush2.xpose.msra.mxu0 0.0
        %2074 = vmatprep.subr.mxu0 0.0
        %2075 = vmatpush2.xpose.msra.mxu0 0.0
        %2076 = vmatprep.subr.mxu0 0.0
        %2077 = vmatpush2.xpose.msra.mxu0 0.0
        %2078 = vmatprep.subr.mxu0 0.0
        %2079 = vmatpush2.xpose.msra.mxu0 0.0
        %2080 = vmatprep.subr.mxu0 0.0
        %2081 = vmatpush2.xpose.msra.mxu0 0.0
        %2082 = vmatprep.subr.mxu0 0.0
        %2083 = vmatpush2.xpose.msra.mxu0 0.0
        %2084 = vmatprep.mubr.f32.mxu0 %v1267
        %2085 = vmatmul.mubr.f32.gmra.mxu0 %v1266
        %v2086 = vpop.f32.mrf.mxu0
        %v2087 = vadd.f32 %v2017, %v2086
        %v2088 = vpop.f32.mrf.mxu0
        %2089 = vdwg.mxu0
        %v2090 = vadd.f32 %v1529, %v2087
        %vm2091 = vcmask 261120
        %2092 = vst.msk [vmem:[%s147] sm:$0xff] %vm2091, %v2090
        %s2093 = sand.u32 %s66, 1
        %s2094 = scalar_lea.sflag [#allocation4], %s2093
        %s2095 = sand.u32 %s66, 1
        %s2096 = smul.addr %s2095, 8
        %s2097 = scalar_lea.vmem [#allocation5], %s2096
        // Predicated region
        $region33: #{tpu_custom_call.1} parent=23 // pred_check
          %p2098 = pneg %p76
        $region34: #{tpu_custom_call.1} parent=23 // pred_check_branch
          %2100 = sbr.rel (%p2098) target = $region36
        $region35: #{tpu_custom_call.1} parent=23 // pred_region
          %s2102 = ssub.s32 128, 128
          %2103 = vsyncadd %s2094, %s2102
          %s2104 = smul.addr %s22, 128
          %s2105 = scalar_lea.hbm %s1, %s2104
          %s2107 = sshll.u32 %s2097, 4
          %s2108 = int_to_ptr.vmem [resolvable:$true] %s2107
          %2110 = dma.vmem_to_hbm [thread:$0]  %s2108, 128, %s2105, %s2094
        $region36: #{tpu_custom_call.1} parent=23 // pred_fallthru
          _
      $region24: #{tpu_custom_call.1} parent=5 // pred_fallthru
        _
      %p2111 = scmp.le.s32.totalorder 2, %s13
      // Predicated region
      $region37: #{tpu_custom_call.1} parent=5 // pred_check
        %p2112 = pneg %p2111
      $region38: #{tpu_custom_call.1} parent=5 // pred_check_branch
        %2114 = sbr.rel (%p2112) target = $region40
      $region39: #{tpu_custom_call.1} parent=5 // pred_region
        %s2115 = ssub.s32 %s13, 2
        // Predicated region
        $region41: #{tpu_custom_call.1} parent=39 // pred_check
          %p2116 = pneg %p82
        $region42: #{tpu_custom_call.1} parent=39 // pred_check_branch
          %2118 = sbr.rel (%p2116) target = $region44
        $region43: #{tpu_custom_call.1} parent=39 // pred_region
          %s2119 = sand.u32 %s67, 1
          %s2120 = scalar_lea.sflag [#allocation4], %s2119
          %s2121 = sand.u32 %s67, 1
          %s2122 = smul.addr %s2121, 8
          %s2123 = scalar_lea.vmem [#allocation5], %s2122
          %2124 = dma.done %s2120, 128
        $region44: #{tpu_custom_call.1} parent=39 // pred_fallthru
          _
      $region40: #{tpu_custom_call.1} parent=5 // pred_fallthru
        _
    $region6: #{tpu_custom_call.1} parent=1 // loop_footer
      %s17 = sadd.s32 1, %s13
    $region7: #{tpu_custom_call.1} parent=1 // loop_footer_branch
      %12 = sbr.rel target = $region3
    $region8: #{tpu_custom_call.1} parent=1 // loop_exit
      _
    %2125 = vsyncpa [#allocation3], 1
    %s2126 = scalar_lea.sflag [#allocation3], 1
    %2127 = vsyncpa %s2126, 1
    %2128 = vsyncpa [#allocation4], 1
    %s2129 = scalar_lea.sflag [#allocation4], 1
    %2130 = vsyncpa %s2129, 1

</llo_original>
